<compile_context>
chip_gen: v7x
topology: tpu7x:2x2x1
jax: 0.10.0
libtpu: 0.0.40
codegen_flags: <defaults>
</compile_context>

<pallas_src>
import jax
import jax.numpy as jnp
from jax.experimental import pallas as pl
from jax.experimental.pallas import tpu as pltpu

# ---- model hyper-parameters (scaled-down, structurally identical) ----
C_IN = 1
C1, K1 = 16, 15          # conv1: Conv1d(1, 16, 15)
C2, K2 = 4, 18           # conv2: Conv1d(16, 4, 18)
L_IN = 159               # -> L1 = 145 -> L2 = 128   (original: 20531 -> 20500)
L1 = L_IN - K1 + 1
L2 = L1 - K2 + 1
HIDDEN = 32              # hidden_size1
NUM_CLASSES = 4          # num_classes
BATCH = 2


def _network_kernel(x_ref, w1_ref, w2_ref, fw1_ref, fb1_ref, fw2_ref, fb2_ref,
                    out_ref, col1_ref, col2_ref, flat_ref):
    # x_ref   : (B, L_IN)
    # w1_ref  : (C1, K1+1)        conv1 weights with bias folded as last column
    # w2_ref  : (C2, K2*C1+1)     conv2 weights (k-major, c1-minor) + bias column
    # fw1_ref : (C2*L2, HIDDEN)   fc1 weight, pre-transposed
    # fb1_ref : (1, HIDDEN)
    # fw2_ref : (HIDDEN, NUM_CLASSES)
    # fb2_ref : (1, NUM_CLASSES)
    # out_ref : (B, NUM_CLASSES)
    # col1_ref: VMEM (K1+1, L1)       conv1 im2col (+ ones row for bias)
    # col2_ref: VMEM (K2*C1+1, L2)    conv2 im2col (+ ones row for bias)
    # flat_ref: VMEM (B, C2*L2)       channel-major flatten feeding fc1
    bsz = x_ref.shape[0]

    # Ones rows for the folded-bias matmuls (written once, reused for all rows).
    col1_ref[K1:K1 + 1, :] = jnp.ones((1, L1), jnp.float32)
    col2_ref[K2 * C1:K2 * C1 + 1, :] = jnp.ones((1, L2), jnp.float32)

    w1 = w1_ref[...]                                   # (C1, K1+1)
    w2 = w2_ref[...]                                   # (C2, K2*C1+1)

    for b in range(bsz):                               # static unroll (B=2)
        x_row = x_ref[b:b + 1, :]                      # (1, L_IN)

        # ---- conv1: im2col (K1+1, L1), one MXU matmul (C1,K1+1)x(K1+1,L1) ----
        for k in range(K1):                            # shifts -> XLU
            col1_ref[k:k + 1, :] = x_row[:, k:k + L1]
        h1 = jnp.maximum(
            jnp.dot(w1, col1_ref[...], preferred_element_type=jnp.float32),
            0.0)                                       # (C1, L1), bias + ReLU

        # ---- conv2: im2col rows are (k, c1) blocks so that
        #      col2[k*C1 + c1, t] = h1[c1, t+k]; one (C2, K2*C1+1) matmul ----
        for k in range(K2):                            # aligned (C1,L2) block stores
            col2_ref[k * C1:(k + 1) * C1, :] = h1[:, k:k + L2]
        h2 = jnp.maximum(
            jnp.dot(w2, col2_ref[...], preferred_element_type=jnp.float32),
            0.0)                                       # (C2, L2), bias + ReLU

        # ---- channel-major flatten (matches torch .view(-1, C2*L2)) ----
        for c in range(C2):                            # lane-tile-aligned writes
            flat_ref[b:b + 1, c * L2:(c + 1) * L2] = h2[c:c + 1, :]

    # ---- fc1 / fc2 / softmax on the whole batch at once ----
    flat = flat_ref[...]                               # (B, C2*L2)
    z1 = jnp.maximum(
        jnp.dot(flat, fw1_ref[...], preferred_element_type=jnp.float32)
        + fb1_ref[...], 0.0)                           # (B, HIDDEN)
    z2 = jnp.dot(z1, fw2_ref[...],
                 preferred_element_type=jnp.float32) + fb2_ref[...]
    m = jnp.max(z2, axis=1, keepdims=True)
    e = jnp.exp(z2 - m)
    out_ref[...] = e / jnp.sum(e, axis=1, keepdims=True)


def network_forward(x, params):
    """x: (B, 1, L_IN) float32 (NCW). Returns (B, NUM_CLASSES) softmax probs."""
    w1, b1, w2, b2, W_fc1, b_fc1, W_fc2, b_fc2 = params
    B = x.shape[0]
    x2 = x.reshape(B, L_IN)                                           # drop Cin=1

    # Parameter re-packing into kernel-friendly layouts (pure glue).
    w1_aug = jnp.concatenate([w1.reshape(C1, K1), b1[:, None]], axis=1)   # (C1, K1+1)
    w2_km = jnp.transpose(w2, (0, 2, 1)).reshape(C2, K2 * C1)             # (C2, K2*C1)
    w2_aug = jnp.concatenate([w2_km, b2[:, None]], axis=1)                # (C2, K2*C1+1)
    fw1 = W_fc1.T                                                         # (C2*L2, H)
    fb1 = b_fc1.reshape(1, HIDDEN)
    fw2 = W_fc2.T                                                         # (H, NC)
    fb2 = b_fc2.reshape(1, NUM_CLASSES)

    return pl.pallas_call(
        _network_kernel,
        out_shape=jax.ShapeDtypeStruct((B, NUM_CLASSES), jnp.float32),
        grid_spec=pltpu.PrefetchScalarGridSpec(
            num_scalar_prefetch=0,
            grid=(1,),
            in_specs=[
                pl.BlockSpec((B, L_IN), lambda i: (0, 0)),
                pl.BlockSpec((C1, K1 + 1), lambda i: (0, 0)),
                pl.BlockSpec((C2, K2 * C1 + 1), lambda i: (0, 0)),
                pl.BlockSpec((C2 * L2, HIDDEN), lambda i: (0, 0)),
                pl.BlockSpec((1, HIDDEN), lambda i: (0, 0)),
                pl.BlockSpec((HIDDEN, NUM_CLASSES), lambda i: (0, 0)),
                pl.BlockSpec((1, NUM_CLASSES), lambda i: (0, 0)),
            ],
            out_specs=pl.BlockSpec((B, NUM_CLASSES), lambda i: (0, 0)),
            scratch_shapes=[
                pltpu.VMEM((K1 + 1, L1), jnp.float32),
                pltpu.VMEM((K2 * C1 + 1, L2), jnp.float32),
                pltpu.VMEM((B, C2 * L2), jnp.float32),
            ]),
        compiler_params=pltpu.CompilerParams(
            dimension_semantics=("arbitrary",)),
    )(x2, w1_aug, w2_aug, fw1, fb1, fw2, fb2)


def reference_forward(x, params):
    """Pure-JAX reference mirroring the PyTorch forward exactly."""
    w1, b1, w2, b2, W_fc1, b_fc1, W_fc2, b_fc2 = params
    dn = ('NCH', 'OIH', 'NCH')
    hi = jax.lax.Precision.HIGHEST
    h1 = jax.lax.conv_general_dilated(x, w1, (1,), 'VALID',
                                      dimension_numbers=dn, precision=hi)
    h1 = jax.nn.relu(h1 + b1[None, :, None])
    h2 = jax.lax.conv_general_dilated(h1, w2, (1,), 'VALID',
                                      dimension_numbers=dn, precision=hi)
    h2 = jax.nn.relu(h2 + b2[None, :, None])
    flat = h2.reshape(x.shape[0], C2 * L2)
    z1 = jax.nn.relu(jnp.dot(flat, W_fc1.T, precision=hi) + b_fc1)
    z2 = jnp.dot(z1, W_fc2.T, precision=hi) + b_fc2
    return jax.nn.softmax(z2, axis=1)


if __name__ == "__main__":
    key = jax.random.PRNGKey(0)
    ks = jax.random.split(key, 9)

    def u(k, shape, fan_in):  # PyTorch-style uniform(-1/sqrt(fan_in), 1/sqrt(fan_in))
        bound = 1.0 / float(fan_in) ** 0.5
        return jax.random.uniform(k, shape, jnp.float32, -bound, bound)

    w1 = u(ks[0], (C1, C_IN, K1), C_IN * K1)
    b1 = u(ks[1], (C1,), C_IN * K1)
    w2 = u(ks[2], (C2, C1, K2), C1 * K2)
    b2 = u(ks[3], (C2,), C1 * K2)
    W_fc1 = u(ks[4], (HIDDEN, C2 * L2), C2 * L2)
    b_fc1 = u(ks[5], (HIDDEN,), C2 * L2)
    W_fc2 = u(ks[6], (NUM_CLASSES, HIDDEN), HIDDEN)
    b_fc2 = u(ks[7], (NUM_CLASSES,), HIDDEN)
    params = (w1, b1, w2, b2, W_fc1, b_fc1, W_fc2, b_fc2)

    x = jax.random.normal(ks[8], (BATCH, C_IN, L_IN), jnp.float32)

    out = jax.block_until_ready(network_forward(x, params))
    ref = jax.block_until_ready(reference_forward(x, params))

    assert out.shape == (BATCH, NUM_CLASSES)
    assert bool(jnp.all(jnp.isfinite(out)))
    max_err = float(jnp.max(jnp.abs(out - ref)))
    assert max_err < 1e-3, f"mismatch vs reference: {max_err}"
    print("KERNEL_OK")
</pallas_src>

<mosaic_0001>
module attributes {stable_mosaic.version = 11 : i64} {
  func.func @_network_kernel(%arg0: i32, %arg1: memref<2x159xf32, #tpu.memory_space<vmem>>, %arg2: memref<16x16xf32, #tpu.memory_space<vmem>>, %arg3: memref<4x289xf32, #tpu.memory_space<vmem>>, %arg4: memref<512x32xf32, #tpu.memory_space<vmem>>, %arg5: memref<1x32xf32, #tpu.memory_space<vmem>>, %arg6: memref<32x4xf32, #tpu.memory_space<vmem>>, %arg7: memref<1x4xf32, #tpu.memory_space<vmem>>, %arg8: memref<2x4xf32, #tpu.memory_space<vmem>>, %arg9: memref<16x145xf32, #tpu.memory_space<vmem>>, %arg10: memref<289x128xf32, #tpu.memory_space<vmem>>, %arg11: memref<2x512xf32, #tpu.memory_space<vmem>>) attributes {dimension_semantics = [#tpu.dimension_semantics<arbitrary>], iteration_bounds = array<i64: 1>, scalar_prefetch = 0 : i64, scratch_operands = 3 : i64, tpu.core_type = #tpu.core_type<tc>, window_params = [{pipeline_mode = #tpu.pipeline_mode<synchronous>, transform_indices = @transform_0, window_bounds = array<i64: 2, 159>}, {pipeline_mode = #tpu.pipeline_mode<synchronous>, transform_indices = @transform_1, window_bounds = array<i64: 16, 16>}, {pipeline_mode = #tpu.pipeline_mode<synchronous>, transform_indices = @transform_2, window_bounds = array<i64: 4, 289>}, {pipeline_mode = #tpu.pipeline_mode<synchronous>, transform_indices = @transform_3, window_bounds = array<i64: 512, 32>}, {pipeline_mode = #tpu.pipeline_mode<synchronous>, transform_indices = @transform_4, window_bounds = array<i64: 1, 32>}, {pipeline_mode = #tpu.pipeline_mode<synchronous>, transform_indices = @transform_5, window_bounds = array<i64: 32, 4>}, {pipeline_mode = #tpu.pipeline_mode<synchronous>, transform_indices = @transform_6, window_bounds = array<i64: 1, 4>}, {pipeline_mode = #tpu.pipeline_mode<synchronous>, transform_indices = @transform_7, window_bounds = array<i64: 2, 4>}]} {
    %cst = arith.constant 1.000000e+00 : f32
    %0 = vector.broadcast %cst : f32 to vector<1x145xf32>
    %c15 = arith.constant 15 : index
    %c0 = arith.constant 0 : index
    %1 = vector.load %arg9[%c15, %c0] : memref<16x145xf32, #tpu.memory_space<vmem>>, vector<1x145xf32>
    tpu.vector_store %arg9[%c15, %c0], %0 {strides = array<i32>} : memref<16x145xf32, #tpu.memory_space<vmem>>, vector<1x145xf32>,
    %cst_0 = arith.constant 1.000000e+00 : f32
    %2 = vector.broadcast %cst_0 : f32 to vector<1x128xf32>
    %c288 = arith.constant 288 : index
    %c0_1 = arith.constant 0 : index
    %3 = vector.load %arg10[%c288, %c0_1] : memref<289x128xf32, #tpu.memory_space<vmem>>, vector<1x128xf32>
    tpu.vector_store %arg10[%c288, %c0_1], %2 {strides = array<i32>} : memref<289x128xf32, #tpu.memory_space<vmem>>, vector<1x128xf32>,
    %c0_2 = arith.constant 0 : index
    %c0_3 = arith.constant 0 : index
    %4 = vector.load %arg2[%c0_2, %c0_3] : memref<16x16xf32, #tpu.memory_space<vmem>>, vector<16x16xf32>
    %c0_4 = arith.constant 0 : index
    %c0_5 = arith.constant 0 : index
    %5 = vector.load %arg3[%c0_4, %c0_5] : memref<4x289xf32, #tpu.memory_space<vmem>>, vector<4x289xf32>
    %c0_6 = arith.constant 0 : index
    %c0_7 = arith.constant 0 : index
    %6 = vector.load %arg1[%c0_6, %c0_7] : memref<2x159xf32, #tpu.memory_space<vmem>>, vector<1x159xf32>
    %7 = vector.extract_strided_slice %6 {offsets = [0, 0], sizes = [1, 145], strides = [1, 1]} : vector<1x159xf32> to vector<1x145xf32>
    %c0_8 = arith.constant 0 : index
    %c0_9 = arith.constant 0 : index
    %8 = vector.load %arg9[%c0_8, %c0_9] : memref<16x145xf32, #tpu.memory_space<vmem>>, vector<1x145xf32>
    tpu.vector_store %arg9[%c0_8, %c0_9], %7 {strides = array<i32>} : memref<16x145xf32, #tpu.memory_space<vmem>>, vector<1x145xf32>,
    %9 = vector.extract_strided_slice %6 {offsets = [0, 1], sizes = [1, 145], strides = [1, 1]} : vector<1x159xf32> to vector<1x145xf32>
    %c1 = arith.constant 1 : index
    %c0_10 = arith.constant 0 : index
    %10 = vector.load %arg9[%c1, %c0_10] : memref<16x145xf32, #tpu.memory_space<vmem>>, vector<1x145xf32>
    tpu.vector_store %arg9[%c1, %c0_10], %9 {strides = array<i32>} : memref<16x145xf32, #tpu.memory_space<vmem>>, vector<1x145xf32>,
    %11 = vector.extract_strided_slice %6 {offsets = [0, 2], sizes = [1, 145], strides = [1, 1]} : vector<1x159xf32> to vector<1x145xf32>
    %c2 = arith.constant 2 : index
    %c0_11 = arith.constant 0 : index
    %12 = vector.load %arg9[%c2, %c0_11] : memref<16x145xf32, #tpu.memory_space<vmem>>, vector<1x145xf32>
    tpu.vector_store %arg9[%c2, %c0_11], %11 {strides = array<i32>} : memref<16x145xf32, #tpu.memory_space<vmem>>, vector<1x145xf32>,
    %13 = vector.extract_strided_slice %6 {offsets = [0, 3], sizes = [1, 145], strides = [1, 1]} : vector<1x159xf32> to vector<1x145xf32>
    %c3 = arith.constant 3 : index
    %c0_12 = arith.constant 0 : index
    %14 = vector.load %arg9[%c3, %c0_12] : memref<16x145xf32, #tpu.memory_space<vmem>>, vector<1x145xf32>
    tpu.vector_store %arg9[%c3, %c0_12], %13 {strides = array<i32>} : memref<16x145xf32, #tpu.memory_space<vmem>>, vector<1x145xf32>,
    %15 = vector.extract_strided_slice %6 {offsets = [0, 4], sizes = [1, 145], strides = [1, 1]} : vector<1x159xf32> to vector<1x145xf32>
    %c4 = arith.constant 4 : index
    %c0_13 = arith.constant 0 : index
    %16 = vector.load %arg9[%c4, %c0_13] : memref<16x145xf32, #tpu.memory_space<vmem>>, vector<1x145xf32>
    tpu.vector_store %arg9[%c4, %c0_13], %15 {strides = array<i32>} : memref<16x145xf32, #tpu.memory_space<vmem>>, vector<1x145xf32>,
    %17 = vector.extract_strided_slice %6 {offsets = [0, 5], sizes = [1, 145], strides = [1, 1]} : vector<1x159xf32> to vector<1x145xf32>
    %c5 = arith.constant 5 : index
    %c0_14 = arith.constant 0 : index
    %18 = vector.load %arg9[%c5, %c0_14] : memref<16x145xf32, #tpu.memory_space<vmem>>, vector<1x145xf32>
    tpu.vector_store %arg9[%c5, %c0_14], %17 {strides = array<i32>} : memref<16x145xf32, #tpu.memory_space<vmem>>, vector<1x145xf32>,
    %19 = vector.extract_strided_slice %6 {offsets = [0, 6], sizes = [1, 145], strides = [1, 1]} : vector<1x159xf32> to vector<1x145xf32>
    %c6 = arith.constant 6 : index
    %c0_15 = arith.constant 0 : index
    %20 = vector.load %arg9[%c6, %c0_15] : memref<16x145xf32, #tpu.memory_space<vmem>>, vector<1x145xf32>
    tpu.vector_store %arg9[%c6, %c0_15], %19 {strides = array<i32>} : memref<16x145xf32, #tpu.memory_space<vmem>>, vector<1x145xf32>,
    %21 = vector.extract_strided_slice %6 {offsets = [0, 7], sizes = [1, 145], strides = [1, 1]} : vector<1x159xf32> to vector<1x145xf32>
    %c7 = arith.constant 7 : index
    %c0_16 = arith.constant 0 : index
    %22 = vector.load %arg9[%c7, %c0_16] : memref<16x145xf32, #tpu.memory_space<vmem>>, vector<1x145xf32>
    tpu.vector_store %arg9[%c7, %c0_16], %21 {strides = array<i32>} : memref<16x145xf32, #tpu.memory_space<vmem>>, vector<1x145xf32>,
    %23 = vector.extract_strided_slice %6 {offsets = [0, 8], sizes = [1, 145], strides = [1, 1]} : vector<1x159xf32> to vector<1x145xf32>
    %c8 = arith.constant 8 : index
    %c0_17 = arith.constant 0 : index
    %24 = vector.load %arg9[%c8, %c0_17] : memref<16x145xf32, #tpu.memory_space<vmem>>, vector<1x145xf32>
    tpu.vector_store %arg9[%c8, %c0_17], %23 {strides = array<i32>} : memref<16x145xf32, #tpu.memory_space<vmem>>, vector<1x145xf32>,
    %25 = vector.extract_strided_slice %6 {offsets = [0, 9], sizes = [1, 145], strides = [1, 1]} : vector<1x159xf32> to vector<1x145xf32>
    %c9 = arith.constant 9 : index
    %c0_18 = arith.constant 0 : index
    %26 = vector.load %arg9[%c9, %c0_18] : memref<16x145xf32, #tpu.memory_space<vmem>>, vector<1x145xf32>
    tpu.vector_store %arg9[%c9, %c0_18], %25 {strides = array<i32>} : memref<16x145xf32, #tpu.memory_space<vmem>>, vector<1x145xf32>,
    %27 = vector.extract_strided_slice %6 {offsets = [0, 10], sizes = [1, 145], strides = [1, 1]} : vector<1x159xf32> to vector<1x145xf32>
    %c10 = arith.constant 10 : index
    %c0_19 = arith.constant 0 : index
    %28 = vector.load %arg9[%c10, %c0_19] : memref<16x145xf32, #tpu.memory_space<vmem>>, vector<1x145xf32>
    tpu.vector_store %arg9[%c10, %c0_19], %27 {strides = array<i32>} : memref<16x145xf32, #tpu.memory_space<vmem>>, vector<1x145xf32>,
    %29 = vector.extract_strided_slice %6 {offsets = [0, 11], sizes = [1, 145], strides = [1, 1]} : vector<1x159xf32> to vector<1x145xf32>
    %c11 = arith.constant 11 : index
    %c0_20 = arith.constant 0 : index
    %30 = vector.load %arg9[%c11, %c0_20] : memref<16x145xf32, #tpu.memory_space<vmem>>, vector<1x145xf32>
    tpu.vector_store %arg9[%c11, %c0_20], %29 {strides = array<i32>} : memref<16x145xf32, #tpu.memory_space<vmem>>, vector<1x145xf32>,
    %31 = vector.extract_strided_slice %6 {offsets = [0, 12], sizes = [1, 145], strides = [1, 1]} : vector<1x159xf32> to vector<1x145xf32>
    %c12 = arith.constant 12 : index
    %c0_21 = arith.constant 0 : index
    %32 = vector.load %arg9[%c12, %c0_21] : memref<16x145xf32, #tpu.memory_space<vmem>>, vector<1x145xf32>
    tpu.vector_store %arg9[%c12, %c0_21], %31 {strides = array<i32>} : memref<16x145xf32, #tpu.memory_space<vmem>>, vector<1x145xf32>,
    %33 = vector.extract_strided_slice %6 {offsets = [0, 13], sizes = [1, 145], strides = [1, 1]} : vector<1x159xf32> to vector<1x145xf32>
    %c13 = arith.constant 13 : index
    %c0_22 = arith.constant 0 : index
    %34 = vector.load %arg9[%c13, %c0_22] : memref<16x145xf32, #tpu.memory_space<vmem>>, vector<1x145xf32>
    tpu.vector_store %arg9[%c13, %c0_22], %33 {strides = array<i32>} : memref<16x145xf32, #tpu.memory_space<vmem>>, vector<1x145xf32>,
    %35 = vector.extract_strided_slice %6 {offsets = [0, 14], sizes = [1, 145], strides = [1, 1]} : vector<1x159xf32> to vector<1x145xf32>
    %c14 = arith.constant 14 : index
    %c0_23 = arith.constant 0 : index
    %36 = vector.load %arg9[%c14, %c0_23] : memref<16x145xf32, #tpu.memory_space<vmem>>, vector<1x145xf32>
    tpu.vector_store %arg9[%c14, %c0_23], %35 {strides = array<i32>} : memref<16x145xf32, #tpu.memory_space<vmem>>, vector<1x145xf32>,
    %c0_24 = arith.constant 0 : index
    %c0_25 = arith.constant 0 : index
    %37 = vector.load %arg9[%c0_24, %c0_25] : memref<16x145xf32, #tpu.memory_space<vmem>>, vector<16x145xf32>
    %cst_26 = arith.constant dense<0.000000e+00> : vector<16x145xf32>
    %38 = tpu.matmul %4, %37, %cst_26 {dimension_numbers = #tpu.dot_dimension_numbers<[1], [0], [0], [1], [0, 0, 1, 1], [], []>} : vector<16x16xf32>, vector<16x145xf32>, vector<16x145xf32> -> vector<16x145xf32>
    %cst_27 = arith.constant 0.000000e+00 : f32
    %39 = vector.broadcast %cst_27 : f32 to vector<16x145xf32>
    %40 = arith.maximumf %38, %39 : vector<16x145xf32>
    %41 = vector.extract_strided_slice %40 {offsets = [0, 0], sizes = [16, 128], strides = [1, 1]} : vector<16x145xf32> to vector<16x128xf32>
    %c0_28 = arith.constant 0 : index
    %c0_29 = arith.constant 0 : index
    %42 = vector.load %arg10[%c0_28, %c0_29] : memref<289x128xf32, #tpu.memory_space<vmem>>, vector<16x128xf32>
    tpu.vector_store %arg10[%c0_28, %c0_29], %41 {strides = array<i32>} : memref<289x128xf32, #tpu.memory_space<vmem>>, vector<16x128xf32>,
    %43 = vector.extract_strided_slice %40 {offsets = [0, 1], sizes = [16, 128], strides = [1, 1]} : vector<16x145xf32> to vector<16x128xf32>
    %c16 = arith.constant 16 : index
    %c0_30 = arith.constant 0 : index
    %44 = vector.load %arg10[%c16, %c0_30] : memref<289x128xf32, #tpu.memory_space<vmem>>, vector<16x128xf32>
    tpu.vector_store %arg10[%c16, %c0_30], %43 {strides = array<i32>} : memref<289x128xf32, #tpu.memory_space<vmem>>, vector<16x128xf32>,
    %45 = vector.extract_strided_slice %40 {offsets = [0, 2], sizes = [16, 128], strides = [1, 1]} : vector<16x145xf32> to vector<16x128xf32>
    %c32 = arith.constant 32 : index
    %c0_31 = arith.constant 0 : index
    %46 = vector.load %arg10[%c32, %c0_31] : memref<289x128xf32, #tpu.memory_space<vmem>>, vector<16x128xf32>
    tpu.vector_store %arg10[%c32, %c0_31], %45 {strides = array<i32>} : memref<289x128xf32, #tpu.memory_space<vmem>>, vector<16x128xf32>,
    %47 = vector.extract_strided_slice %40 {offsets = [0, 3], sizes = [16, 128], strides = [1, 1]} : vector<16x145xf32> to vector<16x128xf32>
    %c48 = arith.constant 48 : index
    %c0_32 = arith.constant 0 : index
    %48 = vector.load %arg10[%c48, %c0_32] : memref<289x128xf32, #tpu.memory_space<vmem>>, vector<16x128xf32>
    tpu.vector_store %arg10[%c48, %c0_32], %47 {strides = array<i32>} : memref<289x128xf32, #tpu.memory_space<vmem>>, vector<16x128xf32>,
    %49 = vector.extract_strided_slice %40 {offsets = [0, 4], sizes = [16, 128], strides = [1, 1]} : vector<16x145xf32> to vector<16x128xf32>
    %c64 = arith.constant 64 : index
    %c0_33 = arith.constant 0 : index
    %50 = vector.load %arg10[%c64, %c0_33] : memref<289x128xf32, #tpu.memory_space<vmem>>, vector<16x128xf32>
    tpu.vector_store %arg10[%c64, %c0_33], %49 {strides = array<i32>} : memref<289x128xf32, #tpu.memory_space<vmem>>, vector<16x128xf32>,
    %51 = vector.extract_strided_slice %40 {offsets = [0, 5], sizes = [16, 128], strides = [1, 1]} : vector<16x145xf32> to vector<16x128xf32>
    %c80 = arith.constant 80 : index
    %c0_34 = arith.constant 0 : index
    %52 = vector.load %arg10[%c80, %c0_34] : memref<289x128xf32, #tpu.memory_space<vmem>>, vector<16x128xf32>
    tpu.vector_store %arg10[%c80, %c0_34], %51 {strides = array<i32>} : memref<289x128xf32, #tpu.memory_space<vmem>>, vector<16x128xf32>,
    %53 = vector.extract_strided_slice %40 {offsets = [0, 6], sizes = [16, 128], strides = [1, 1]} : vector<16x145xf32> to vector<16x128xf32>
    %c96 = arith.constant 96 : index
    %c0_35 = arith.constant 0 : index
    %54 = vector.load %arg10[%c96, %c0_35] : memref<289x128xf32, #tpu.memory_space<vmem>>, vector<16x128xf32>
    tpu.vector_store %arg10[%c96, %c0_35], %53 {strides = array<i32>} : memref<289x128xf32, #tpu.memory_space<vmem>>, vector<16x128xf32>,
    %55 = vector.extract_strided_slice %40 {offsets = [0, 7], sizes = [16, 128], strides = [1, 1]} : vector<16x145xf32> to vector<16x128xf32>
    %c112 = arith.constant 112 : index
    %c0_36 = arith.constant 0 : index
    %56 = vector.load %arg10[%c112, %c0_36] : memref<289x128xf32, #tpu.memory_space<vmem>>, vector<16x128xf32>
    tpu.vector_store %arg10[%c112, %c0_36], %55 {strides = array<i32>} : memref<289x128xf32, #tpu.memory_space<vmem>>, vector<16x128xf32>,
    %57 = vector.extract_strided_slice %40 {offsets = [0, 8], sizes = [16, 128], strides = [1, 1]} : vector<16x145xf32> to vector<16x128xf32>
    %c128 = arith.constant 128 : index
    %c0_37 = arith.constant 0 : index
    %58 = vector.load %arg10[%c128, %c0_37] : memref<289x128xf32, #tpu.memory_space<vmem>>, vector<16x128xf32>
    tpu.vector_store %arg10[%c128, %c0_37], %57 {strides = array<i32>} : memref<289x128xf32, #tpu.memory_space<vmem>>, vector<16x128xf32>,
    %59 = vector.extract_strided_slice %40 {offsets = [0, 9], sizes = [16, 128], strides = [1, 1]} : vector<16x145xf32> to vector<16x128xf32>
    %c144 = arith.constant 144 : index
    %c0_38 = arith.constant 0 : index
    %60 = vector.load %arg10[%c144, %c0_38] : memref<289x128xf32, #tpu.memory_space<vmem>>, vector<16x128xf32>
    tpu.vector_store %arg10[%c144, %c0_38], %59 {strides = array<i32>} : memref<289x128xf32, #tpu.memory_space<vmem>>, vector<16x128xf32>,
    %61 = vector.extract_strided_slice %40 {offsets = [0, 10], sizes = [16, 128], strides = [1, 1]} : vector<16x145xf32> to vector<16x128xf32>
    %c160 = arith.constant 160 : index
    %c0_39 = arith.constant 0 : index
    %62 = vector.load %arg10[%c160, %c0_39] : memref<289x128xf32, #tpu.memory_space<vmem>>, vector<16x128xf32>
    tpu.vector_store %arg10[%c160, %c0_39], %61 {strides = array<i32>} : memref<289x128xf32, #tpu.memory_space<vmem>>, vector<16x128xf32>,
    %63 = vector.extract_strided_slice %40 {offsets = [0, 11], sizes = [16, 128], strides = [1, 1]} : vector<16x145xf32> to vector<16x128xf32>
    %c176 = arith.constant 176 : index
    %c0_40 = arith.constant 0 : index
    %64 = vector.load %arg10[%c176, %c0_40] : memref<289x128xf32, #tpu.memory_space<vmem>>, vector<16x128xf32>
    tpu.vector_store %arg10[%c176, %c0_40], %63 {strides = array<i32>} : memref<289x128xf32, #tpu.memory_space<vmem>>, vector<16x128xf32>,
    %65 = vector.extract_strided_slice %40 {offsets = [0, 12], sizes = [16, 128], strides = [1, 1]} : vector<16x145xf32> to vector<16x128xf32>
    %c192 = arith.constant 192 : index
    %c0_41 = arith.constant 0 : index
    %66 = vector.load %arg10[%c192, %c0_41] : memref<289x128xf32, #tpu.memory_space<vmem>>, vector<16x128xf32>
    tpu.vector_store %arg10[%c192, %c0_41], %65 {strides = array<i32>} : memref<289x128xf32, #tpu.memory_space<vmem>>, vector<16x128xf32>,
    %67 = vector.extract_strided_slice %40 {offsets = [0, 13], sizes = [16, 128], strides = [1, 1]} : vector<16x145xf32> to vector<16x128xf32>
    %c208 = arith.constant 208 : index
    %c0_42 = arith.constant 0 : index
    %68 = vector.load %arg10[%c208, %c0_42] : memref<289x128xf32, #tpu.memory_space<vmem>>, vector<16x128xf32>
    tpu.vector_store %arg10[%c208, %c0_42], %67 {strides = array<i32>} : memref<289x128xf32, #tpu.memory_space<vmem>>, vector<16x128xf32>,
    %69 = vector.extract_strided_slice %40 {offsets = [0, 14], sizes = [16, 128], strides = [1, 1]} : vector<16x145xf32> to vector<16x128xf32>
    %c224 = arith.constant 224 : index
    %c0_43 = arith.constant 0 : index
    %70 = vector.load %arg10[%c224, %c0_43] : memref<289x128xf32, #tpu.memory_space<vmem>>, vector<16x128xf32>
    tpu.vector_store %arg10[%c224, %c0_43], %69 {strides = array<i32>} : memref<289x128xf32, #tpu.memory_space<vmem>>, vector<16x128xf32>,
    %71 = vector.extract_strided_slice %40 {offsets = [0, 15], sizes = [16, 128], strides = [1, 1]} : vector<16x145xf32> to vector<16x128xf32>
    %c240 = arith.constant 240 : index
    %c0_44 = arith.constant 0 : index
    %72 = vector.load %arg10[%c240, %c0_44] : memref<289x128xf32, #tpu.memory_space<vmem>>, vector<16x128xf32>
    tpu.vector_store %arg10[%c240, %c0_44], %71 {strides = array<i32>} : memref<289x128xf32, #tpu.memory_space<vmem>>, vector<16x128xf32>,
    %73 = vector.extract_strided_slice %40 {offsets = [0, 16], sizes = [16, 128], strides = [1, 1]} : vector<16x145xf32> to vector<16x128xf32>
    %c256 = arith.constant 256 : index
    %c0_45 = arith.constant 0 : index
    %74 = vector.load %arg10[%c256, %c0_45] : memref<289x128xf32, #tpu.memory_space<vmem>>, vector<16x128xf32>
    tpu.vector_store %arg10[%c256, %c0_45], %73 {strides = array<i32>} : memref<289x128xf32, #tpu.memory_space<vmem>>, vector<16x128xf32>,
    %75 = vector.extract_strided_slice %40 {offsets = [0, 17], sizes = [16, 128], strides = [1, 1]} : vector<16x145xf32> to vector<16x128xf32>
    %c272 = arith.constant 272 : index
    %c0_46 = arith.constant 0 : index
    %76 = vector.load %arg10[%c272, %c0_46] : memref<289x128xf32, #tpu.memory_space<vmem>>, vector<16x128xf32>
    tpu.vector_store %arg10[%c272, %c0_46], %75 {strides = array<i32>} : memref<289x128xf32, #tpu.memory_space<vmem>>, vector<16x128xf32>,
    %c0_47 = arith.constant 0 : index
    %c0_48 = arith.constant 0 : index
    %77 = vector.load %arg10[%c0_47, %c0_48] : memref<289x128xf32, #tpu.memory_space<vmem>>, vector<289x128xf32>
    %cst_49 = arith.constant dense<0.000000e+00> : vector<4x128xf32>
    %78 = tpu.matmul %5, %77, %cst_49 {dimension_numbers = #tpu.dot_dimension_numbers<[1], [0], [0], [1], [0, 0, 1, 1], [], []>} : vector<4x289xf32>, vector<289x128xf32>, vector<4x128xf32> -> vector<4x128xf32>
    %cst_50 = arith.constant 0.000000e+00 : f32
    %79 = vector.broadcast %cst_50 : f32 to vector<4x128xf32>
    %80 = arith.maximumf %78, %79 : vector<4x128xf32>
    %81 = vector.extract_strided_slice %80 {offsets = [0, 0], sizes = [1, 128], strides = [1, 1]} : vector<4x128xf32> to vector<1x128xf32>
    %c0_51 = arith.constant 0 : index
    %c0_52 = arith.constant 0 : index
    %82 = vector.load %arg11[%c0_51, %c0_52] : memref<2x512xf32, #tpu.memory_space<vmem>>, vector<1x128xf32>
    tpu.vector_store %arg11[%c0_51, %c0_52], %81 {strides = array<i32>} : memref<2x512xf32, #tpu.memory_space<vmem>>, vector<1x128xf32>,
    %83 = vector.extract_strided_slice %80 {offsets = [1, 0], sizes = [1, 128], strides = [1, 1]} : vector<4x128xf32> to vector<1x128xf32>
    %c0_53 = arith.constant 0 : index
    %c128_54 = arith.constant 128 : index
    %84 = vector.load %arg11[%c0_53, %c128_54] : memref<2x512xf32, #tpu.memory_space<vmem>>, vector<1x128xf32>
    tpu.vector_store %arg11[%c0_53, %c128_54], %83 {strides = array<i32>} : memref<2x512xf32, #tpu.memory_space<vmem>>, vector<1x128xf32>,
    %85 = vector.extract_strided_slice %80 {offsets = [2, 0], sizes = [1, 128], strides = [1, 1]} : vector<4x128xf32> to vector<1x128xf32>
    %c0_55 = arith.constant 0 : index
    %c256_56 = arith.constant 256 : index
    %86 = vector.load %arg11[%c0_55, %c256_56] : memref<2x512xf32, #tpu.memory_space<vmem>>, vector<1x128xf32>
    tpu.vector_store %arg11[%c0_55, %c256_56], %85 {strides = array<i32>} : memref<2x512xf32, #tpu.memory_space<vmem>>, vector<1x128xf32>,
    %87 = vector.extract_strided_slice %80 {offsets = [3, 0], sizes = [1, 128], strides = [1, 1]} : vector<4x128xf32> to vector<1x128xf32>
    %c0_57 = arith.constant 0 : index
    %c384 = arith.constant 384 : index
    %88 = vector.load %arg11[%c0_57, %c384] : memref<2x512xf32, #tpu.memory_space<vmem>>, vector<1x128xf32>
    tpu.vector_store %arg11[%c0_57, %c384], %87 {strides = array<i32>} : memref<2x512xf32, #tpu.memory_space<vmem>>, vector<1x128xf32>,
    %c1_58 = arith.constant 1 : index
    %c0_59 = arith.constant 0 : index
    %89 = vector.load %arg1[%c1_58, %c0_59] : memref<2x159xf32, #tpu.memory_space<vmem>>, vector<1x159xf32>
    %90 = vector.extract_strided_slice %89 {offsets = [0, 0], sizes = [1, 145], strides = [1, 1]} : vector<1x159xf32> to vector<1x145xf32>
    %c0_60 = arith.constant 0 : index
    %c0_61 = arith.constant 0 : index
    %91 = vector.load %arg9[%c0_60, %c0_61] : memref<16x145xf32, #tpu.memory_space<vmem>>, vector<1x145xf32>
    tpu.vector_store %arg9[%c0_60, %c0_61], %90 {strides = array<i32>} : memref<16x145xf32, #tpu.memory_space<vmem>>, vector<1x145xf32>,
    %92 = vector.extract_strided_slice %89 {offsets = [0, 1], sizes = [1, 145], strides = [1, 1]} : vector<1x159xf32> to vector<1x145xf32>
    %c1_62 = arith.constant 1 : index
    %c0_63 = arith.constant 0 : index
    %93 = vector.load %arg9[%c1_62, %c0_63] : memref<16x145xf32, #tpu.memory_space<vmem>>, vector<1x145xf32>
    tpu.vector_store %arg9[%c1_62, %c0_63], %92 {strides = array<i32>} : memref<16x145xf32, #tpu.memory_space<vmem>>, vector<1x145xf32>,
    %94 = vector.extract_strided_slice %89 {offsets = [0, 2], sizes = [1, 145], strides = [1, 1]} : vector<1x159xf32> to vector<1x145xf32>
    %c2_64 = arith.constant 2 : index
    %c0_65 = arith.constant 0 : index
    %95 = vector.load %arg9[%c2_64, %c0_65] : memref<16x145xf32, #tpu.memory_space<vmem>>, vector<1x145xf32>
    tpu.vector_store %arg9[%c2_64, %c0_65], %94 {strides = array<i32>} : memref<16x145xf32, #tpu.memory_space<vmem>>, vector<1x145xf32>,
    %96 = vector.extract_strided_slice %89 {offsets = [0, 3], sizes = [1, 145], strides = [1, 1]} : vector<1x159xf32> to vector<1x145xf32>
    %c3_66 = arith.constant 3 : index
    %c0_67 = arith.constant 0 : index
    %97 = vector.load %arg9[%c3_66, %c0_67] : memref<16x145xf32, #tpu.memory_space<vmem>>, vector<1x145xf32>
    tpu.vector_store %arg9[%c3_66, %c0_67], %96 {strides = array<i32>} : memref<16x145xf32, #tpu.memory_space<vmem>>, vector<1x145xf32>,
    %98 = vector.extract_strided_slice %89 {offsets = [0, 4], sizes = [1, 145], strides = [1, 1]} : vector<1x159xf32> to vector<1x145xf32>
    %c4_68 = arith.constant 4 : index
    %c0_69 = arith.constant 0 : index
    %99 = vector.load %arg9[%c4_68, %c0_69] : memref<16x145xf32, #tpu.memory_space<vmem>>, vector<1x145xf32>
    tpu.vector_store %arg9[%c4_68, %c0_69], %98 {strides = array<i32>} : memref<16x145xf32, #tpu.memory_space<vmem>>, vector<1x145xf32>,
    %100 = vector.extract_strided_slice %89 {offsets = [0, 5], sizes = [1, 145], strides = [1, 1]} : vector<1x159xf32> to vector<1x145xf32>
    %c5_70 = arith.constant 5 : index
    %c0_71 = arith.constant 0 : index
    %101 = vector.load %arg9[%c5_70, %c0_71] : memref<16x145xf32, #tpu.memory_space<vmem>>, vector<1x145xf32>
    tpu.vector_store %arg9[%c5_70, %c0_71], %100 {strides = array<i32>} : memref<16x145xf32, #tpu.memory_space<vmem>>, vector<1x145xf32>,
    %102 = vector.extract_strided_slice %89 {offsets = [0, 6], sizes = [1, 145], strides = [1, 1]} : vector<1x159xf32> to vector<1x145xf32>
    %c6_72 = arith.constant 6 : index
    %c0_73 = arith.constant 0 : index
    %103 = vector.load %arg9[%c6_72, %c0_73] : memref<16x145xf32, #tpu.memory_space<vmem>>, vector<1x145xf32>
    tpu.vector_store %arg9[%c6_72, %c0_73], %102 {strides = array<i32>} : memref<16x145xf32, #tpu.memory_space<vmem>>, vector<1x145xf32>,
    %104 = vector.extract_strided_slice %89 {offsets = [0, 7], sizes = [1, 145], strides = [1, 1]} : vector<1x159xf32> to vector<1x145xf32>
    %c7_74 = arith.constant 7 : index
    %c0_75 = arith.constant 0 : index
    %105 = vector.load %arg9[%c7_74, %c0_75] : memref<16x145xf32, #tpu.memory_space<vmem>>, vector<1x145xf32>
    tpu.vector_store %arg9[%c7_74, %c0_75], %104 {strides = array<i32>} : memref<16x145xf32, #tpu.memory_space<vmem>>, vector<1x145xf32>,
    %106 = vector.extract_strided_slice %89 {offsets = [0, 8], sizes = [1, 145], strides = [1, 1]} : vector<1x159xf32> to vector<1x145xf32>
    %c8_76 = arith.constant 8 : index
    %c0_77 = arith.constant 0 : index
    %107 = vector.load %arg9[%c8_76, %c0_77] : memref<16x145xf32, #tpu.memory_space<vmem>>, vector<1x145xf32>
    tpu.vector_store %arg9[%c8_76, %c0_77], %106 {strides = array<i32>} : memref<16x145xf32, #tpu.memory_space<vmem>>, vector<1x145xf32>,
    %108 = vector.extract_strided_slice %89 {offsets = [0, 9], sizes = [1, 145], strides = [1, 1]} : vector<1x159xf32> to vector<1x145xf32>
    %c9_78 = arith.constant 9 : index
    %c0_79 = arith.constant 0 : index
    %109 = vector.load %arg9[%c9_78, %c0_79] : memref<16x145xf32, #tpu.memory_space<vmem>>, vector<1x145xf32>
    tpu.vector_store %arg9[%c9_78, %c0_79], %108 {strides = array<i32>} : memref<16x145xf32, #tpu.memory_space<vmem>>, vector<1x145xf32>,
    %110 = vector.extract_strided_slice %89 {offsets = [0, 10], sizes = [1, 145], strides = [1, 1]} : vector<1x159xf32> to vector<1x145xf32>
    %c10_80 = arith.constant 10 : index
    %c0_81 = arith.constant 0 : index
    %111 = vector.load %arg9[%c10_80, %c0_81] : memref<16x145xf32, #tpu.memory_space<vmem>>, vector<1x145xf32>
    tpu.vector_store %arg9[%c10_80, %c0_81], %110 {strides = array<i32>} : memref<16x145xf32, #tpu.memory_space<vmem>>, vector<1x145xf32>,
    %112 = vector.extract_strided_slice %89 {offsets = [0, 11], sizes = [1, 145], strides = [1, 1]} : vector<1x159xf32> to vector<1x145xf32>
    %c11_82 = arith.constant 11 : index
    %c0_83 = arith.constant 0 : index
    %113 = vector.load %arg9[%c11_82, %c0_83] : memref<16x145xf32, #tpu.memory_space<vmem>>, vector<1x145xf32>
    tpu.vector_store %arg9[%c11_82, %c0_83], %112 {strides = array<i32>} : memref<16x145xf32, #tpu.memory_space<vmem>>, vector<1x145xf32>,
    %114 = vector.extract_strided_slice %89 {offsets = [0, 12], sizes = [1, 145], strides = [1, 1]} : vector<1x159xf32> to vector<1x145xf32>
    %c12_84 = arith.constant 12 : index
    %c0_85 = arith.constant 0 : index
    %115 = vector.load %arg9[%c12_84, %c0_85] : memref<16x145xf32, #tpu.memory_space<vmem>>, vector<1x145xf32>
    tpu.vector_store %arg9[%c12_84, %c0_85], %114 {strides = array<i32>} : memref<16x145xf32, #tpu.memory_space<vmem>>, vector<1x145xf32>,
    %116 = vector.extract_strided_slice %89 {offsets = [0, 13], sizes = [1, 145], strides = [1, 1]} : vector<1x159xf32> to vector<1x145xf32>
    %c13_86 = arith.constant 13 : index
    %c0_87 = arith.constant 0 : index
    %117 = vector.load %arg9[%c13_86, %c0_87] : memref<16x145xf32, #tpu.memory_space<vmem>>, vector<1x145xf32>
    tpu.vector_store %arg9[%c13_86, %c0_87], %116 {strides = array<i32>} : memref<16x145xf32, #tpu.memory_space<vmem>>, vector<1x145xf32>,
    %118 = vector.extract_strided_slice %89 {offsets = [0, 14], sizes = [1, 145], strides = [1, 1]} : vector<1x159xf32> to vector<1x145xf32>
    %c14_88 = arith.constant 14 : index
    %c0_89 = arith.constant 0 : index
    %119 = vector.load %arg9[%c14_88, %c0_89] : memref<16x145xf32, #tpu.memory_space<vmem>>, vector<1x145xf32>
    tpu.vector_store %arg9[%c14_88, %c0_89], %118 {strides = array<i32>} : memref<16x145xf32, #tpu.memory_space<vmem>>, vector<1x145xf32>,
    %c0_90 = arith.constant 0 : index
    %c0_91 = arith.constant 0 : index
    %120 = vector.load %arg9[%c0_90, %c0_91] : memref<16x145xf32, #tpu.memory_space<vmem>>, vector<16x145xf32>
    %cst_92 = arith.constant dense<0.000000e+00> : vector<16x145xf32>
    %121 = tpu.matmul %4, %120, %cst_92 {dimension_numbers = #tpu.dot_dimension_numbers<[1], [0], [0], [1], [0, 0, 1, 1], [], []>} : vector<16x16xf32>, vector<16x145xf32>, vector<16x145xf32> -> vector<16x145xf32>
    %cst_93 = arith.constant 0.000000e+00 : f32
    %122 = vector.broadcast %cst_93 : f32 to vector<16x145xf32>
    %123 = arith.maximumf %121, %122 : vector<16x145xf32>
    %124 = vector.extract_strided_slice %123 {offsets = [0, 0], sizes = [16, 128], strides = [1, 1]} : vector<16x145xf32> to vector<16x128xf32>
    %c0_94 = arith.constant 0 : index
    %c0_95 = arith.constant 0 : index
    %125 = vector.load %arg10[%c0_94, %c0_95] : memref<289x128xf32, #tpu.memory_space<vmem>>, vector<16x128xf32>
    tpu.vector_store %arg10[%c0_94, %c0_95], %124 {strides = array<i32>} : memref<289x128xf32, #tpu.memory_space<vmem>>, vector<16x128xf32>,
    %126 = vector.extract_strided_slice %123 {offsets = [0, 1], sizes = [16, 128], strides = [1, 1]} : vector<16x145xf32> to vector<16x128xf32>
    %c16_96 = arith.constant 16 : index
    %c0_97 = arith.constant 0 : index
    %127 = vector.load %arg10[%c16_96, %c0_97] : memref<289x128xf32, #tpu.memory_space<vmem>>, vector<16x128xf32>
    tpu.vector_store %arg10[%c16_96, %c0_97], %126 {strides = array<i32>} : memref<289x128xf32, #tpu.memory_space<vmem>>, vector<16x128xf32>,
    %128 = vector.extract_strided_slice %123 {offsets = [0, 2], sizes = [16, 128], strides = [1, 1]} : vector<16x145xf32> to vector<16x128xf32>
    %c32_98 = arith.constant 32 : index
    %c0_99 = arith.constant 0 : index
    %129 = vector.load %arg10[%c32_98, %c0_99] : memref<289x128xf32, #tpu.memory_space<vmem>>, vector<16x128xf32>
    tpu.vector_store %arg10[%c32_98, %c0_99], %128 {strides = array<i32>} : memref<289x128xf32, #tpu.memory_space<vmem>>, vector<16x128xf32>,
    %130 = vector.extract_strided_slice %123 {offsets = [0, 3], sizes = [16, 128], strides = [1, 1]} : vector<16x145xf32> to vector<16x128xf32>
    %c48_100 = arith.constant 48 : index
    %c0_101 = arith.constant 0 : index
    %131 = vector.load %arg10[%c48_100, %c0_101] : memref<289x128xf32, #tpu.memory_space<vmem>>, vector<16x128xf32>
    tpu.vector_store %arg10[%c48_100, %c0_101], %130 {strides = array<i32>} : memref<289x128xf32, #tpu.memory_space<vmem>>, vector<16x128xf32>,
    %132 = vector.extract_strided_slice %123 {offsets = [0, 4], sizes = [16, 128], strides = [1, 1]} : vector<16x145xf32> to vector<16x128xf32>
    %c64_102 = arith.constant 64 : index
    %c0_103 = arith.constant 0 : index
    %133 = vector.load %arg10[%c64_102, %c0_103] : memref<289x128xf32, #tpu.memory_space<vmem>>, vector<16x128xf32>
    tpu.vector_store %arg10[%c64_102, %c0_103], %132 {strides = array<i32>} : memref<289x128xf32, #tpu.memory_space<vmem>>, vector<16x128xf32>,
    %134 = vector.extract_strided_slice %123 {offsets = [0, 5], sizes = [16, 128], strides = [1, 1]} : vector<16x145xf32> to vector<16x128xf32>
    %c80_104 = arith.constant 80 : index
    %c0_105 = arith.constant 0 : index
    %135 = vector.load %arg10[%c80_104, %c0_105] : memref<289x128xf32, #tpu.memory_space<vmem>>, vector<16x128xf32>
    tpu.vector_store %arg10[%c80_104, %c0_105], %134 {strides = array<i32>} : memref<289x128xf32, #tpu.memory_space<vmem>>, vector<16x128xf32>,
    %136 = vector.extract_strided_slice %123 {offsets = [0, 6], sizes = [16, 128], strides = [1, 1]} : vector<16x145xf32> to vector<16x128xf32>
    %c96_106 = arith.constant 96 : index
    %c0_107 = arith.constant 0 : index
    %137 = vector.load %arg10[%c96_106, %c0_107] : memref<289x128xf32, #tpu.memory_space<vmem>>, vector<16x128xf32>
    tpu.vector_store %arg10[%c96_106, %c0_107], %136 {strides = array<i32>} : memref<289x128xf32, #tpu.memory_space<vmem>>, vector<16x128xf32>,
    %138 = vector.extract_strided_slice %123 {offsets = [0, 7], sizes = [16, 128], strides = [1, 1]} : vector<16x145xf32> to vector<16x128xf32>
    %c112_108 = arith.constant 112 : index
    %c0_109 = arith.constant 0 : index
    %139 = vector.load %arg10[%c112_108, %c0_109] : memref<289x128xf32, #tpu.memory_space<vmem>>, vector<16x128xf32>
    tpu.vector_store %arg10[%c112_108, %c0_109], %138 {strides = array<i32>} : memref<289x128xf32, #tpu.memory_space<vmem>>, vector<16x128xf32>,
    %140 = vector.extract_strided_slice %123 {offsets = [0, 8], sizes = [16, 128], strides = [1, 1]} : vector<16x145xf32> to vector<16x128xf32>
    %c128_110 = arith.constant 128 : index
    %c0_111 = arith.constant 0 : index
    %141 = vector.load %arg10[%c128_110, %c0_111] : memref<289x128xf32, #tpu.memory_space<vmem>>, vector<16x128xf32>
    tpu.vector_store %arg10[%c128_110, %c0_111], %140 {strides = array<i32>} : memref<289x128xf32, #tpu.memory_space<vmem>>, vector<16x128xf32>,
    %142 = vector.extract_strided_slice %123 {offsets = [0, 9], sizes = [16, 128], strides = [1, 1]} : vector<16x145xf32> to vector<16x128xf32>
    %c144_112 = arith.constant 144 : index
    %c0_113 = arith.constant 0 : index
    %143 = vector.load %arg10[%c144_112, %c0_113] : memref<289x128xf32, #tpu.memory_space<vmem>>, vector<16x128xf32>
    tpu.vector_store %arg10[%c144_112, %c0_113], %142 {strides = array<i32>} : memref<289x128xf32, #tpu.memory_space<vmem>>, vector<16x128xf32>,
    %144 = vector.extract_strided_slice %123 {offsets = [0, 10], sizes = [16, 128], strides = [1, 1]} : vector<16x145xf32> to vector<16x128xf32>
    %c160_114 = arith.constant 160 : index
    %c0_115 = arith.constant 0 : index
    %145 = vector.load %arg10[%c160_114, %c0_115] : memref<289x128xf32, #tpu.memory_space<vmem>>, vector<16x128xf32>
    tpu.vector_store %arg10[%c160_114, %c0_115], %144 {strides = array<i32>} : memref<289x128xf32, #tpu.memory_space<vmem>>, vector<16x128xf32>,
    %146 = vector.extract_strided_slice %123 {offsets = [0, 11], sizes = [16, 128], strides = [1, 1]} : vector<16x145xf32> to vector<16x128xf32>
    %c176_116 = arith.constant 176 : index
    %c0_117 = arith.constant 0 : index
    %147 = vector.load %arg10[%c176_116, %c0_117] : memref<289x128xf32, #tpu.memory_space<vmem>>, vector<16x128xf32>
    tpu.vector_store %arg10[%c176_116, %c0_117], %146 {strides = array<i32>} : memref<289x128xf32, #tpu.memory_space<vmem>>, vector<16x128xf32>,
    %148 = vector.extract_strided_slice %123 {offsets = [0, 12], sizes = [16, 128], strides = [1, 1]} : vector<16x145xf32> to vector<16x128xf32>
    %c192_118 = arith.constant 192 : index
    %c0_119 = arith.constant 0 : index
    %149 = vector.load %arg10[%c192_118, %c0_119] : memref<289x128xf32, #tpu.memory_space<vmem>>, vector<16x128xf32>
    tpu.vector_store %arg10[%c192_118, %c0_119], %148 {strides = array<i32>} : memref<289x128xf32, #tpu.memory_space<vmem>>, vector<16x128xf32>,
    %150 = vector.extract_strided_slice %123 {offsets = [0, 13], sizes = [16, 128], strides = [1, 1]} : vector<16x145xf32> to vector<16x128xf32>
    %c208_120 = arith.constant 208 : index
    %c0_121 = arith.constant 0 : index
    %151 = vector.load %arg10[%c208_120, %c0_121] : memref<289x128xf32, #tpu.memory_space<vmem>>, vector<16x128xf32>
    tpu.vector_store %arg10[%c208_120, %c0_121], %150 {strides = array<i32>} : memref<289x128xf32, #tpu.memory_space<vmem>>, vector<16x128xf32>,
    %152 = vector.extract_strided_slice %123 {offsets = [0, 14], sizes = [16, 128], strides = [1, 1]} : vector<16x145xf32> to vector<16x128xf32>
    %c224_122 = arith.constant 224 : index
    %c0_123 = arith.constant 0 : index
    %153 = vector.load %arg10[%c224_122, %c0_123] : memref<289x128xf32, #tpu.memory_space<vmem>>, vector<16x128xf32>
    tpu.vector_store %arg10[%c224_122, %c0_123], %152 {strides = array<i32>} : memref<289x128xf32, #tpu.memory_space<vmem>>, vector<16x128xf32>,
    %154 = vector.extract_strided_slice %123 {offsets = [0, 15], sizes = [16, 128], strides = [1, 1]} : vector<16x145xf32> to vector<16x128xf32>
    %c240_124 = arith.constant 240 : index
    %c0_125 = arith.constant 0 : index
    %155 = vector.load %arg10[%c240_124, %c0_125] : memref<289x128xf32, #tpu.memory_space<vmem>>, vector<16x128xf32>
    tpu.vector_store %arg10[%c240_124, %c0_125], %154 {strides = array<i32>} : memref<289x128xf32, #tpu.memory_space<vmem>>, vector<16x128xf32>,
    %156 = vector.extract_strided_slice %123 {offsets = [0, 16], sizes = [16, 128], strides = [1, 1]} : vector<16x145xf32> to vector<16x128xf32>
    %c256_126 = arith.constant 256 : index
    %c0_127 = arith.constant 0 : index
    %157 = vector.load %arg10[%c256_126, %c0_127] : memref<289x128xf32, #tpu.memory_space<vmem>>, vector<16x128xf32>
    tpu.vector_store %arg10[%c256_126, %c0_127], %156 {strides = array<i32>} : memref<289x128xf32, #tpu.memory_space<vmem>>, vector<16x128xf32>,
    %158 = vector.extract_strided_slice %123 {offsets = [0, 17], sizes = [16, 128], strides = [1, 1]} : vector<16x145xf32> to vector<16x128xf32>
    %c272_128 = arith.constant 272 : index
    %c0_129 = arith.constant 0 : index
    %159 = vector.load %arg10[%c272_128, %c0_129] : memref<289x128xf32, #tpu.memory_space<vmem>>, vector<16x128xf32>
    tpu.vector_store %arg10[%c272_128, %c0_129], %158 {strides = array<i32>} : memref<289x128xf32, #tpu.memory_space<vmem>>, vector<16x128xf32>,
    %c0_130 = arith.constant 0 : index
    %c0_131 = arith.constant 0 : index
    %160 = vector.load %arg10[%c0_130, %c0_131] : memref<289x128xf32, #tpu.memory_space<vmem>>, vector<289x128xf32>
    %cst_132 = arith.constant dense<0.000000e+00> : vector<4x128xf32>
    %161 = tpu.matmul %5, %160, %cst_132 {dimension_numbers = #tpu.dot_dimension_numbers<[1], [0], [0], [1], [0, 0, 1, 1], [], []>} : vector<4x289xf32>, vector<289x128xf32>, vector<4x128xf32> -> vector<4x128xf32>
    %cst_133 = arith.constant 0.000000e+00 : f32
    %162 = vector.broadcast %cst_133 : f32 to vector<4x128xf32>
    %163 = arith.maximumf %161, %162 : vector<4x128xf32>
    %164 = vector.extract_strided_slice %163 {offsets = [0, 0], sizes = [1, 128], strides = [1, 1]} : vector<4x128xf32> to vector<1x128xf32>
    %c1_134 = arith.constant 1 : index
    %c0_135 = arith.constant 0 : index
    %165 = vector.load %arg11[%c1_134, %c0_135] : memref<2x512xf32, #tpu.memory_space<vmem>>, vector<1x128xf32>
    tpu.vector_store %arg11[%c1_134, %c0_135], %164 {strides = array<i32>} : memref<2x512xf32, #tpu.memory_space<vmem>>, vector<1x128xf32>,
    %166 = vector.extract_strided_slice %163 {offsets = [1, 0], sizes = [1, 128], strides = [1, 1]} : vector<4x128xf32> to vector<1x128xf32>
    %c1_136 = arith.constant 1 : index
    %c128_137 = arith.constant 128 : index
    %167 = vector.load %arg11[%c1_136, %c128_137] : memref<2x512xf32, #tpu.memory_space<vmem>>, vector<1x128xf32>
    tpu.vector_store %arg11[%c1_136, %c128_137], %166 {strides = array<i32>} : memref<2x512xf32, #tpu.memory_space<vmem>>, vector<1x128xf32>,
    %168 = vector.extract_strided_slice %163 {offsets = [2, 0], sizes = [1, 128], strides = [1, 1]} : vector<4x128xf32> to vector<1x128xf32>
    %c1_138 = arith.constant 1 : index
    %c256_139 = arith.constant 256 : index
    %169 = vector.load %arg11[%c1_138, %c256_139] : memref<2x512xf32, #tpu.memory_space<vmem>>, vector<1x128xf32>
    tpu.vector_store %arg11[%c1_138, %c256_139], %168 {strides = array<i32>} : memref<2x512xf32, #tpu.memory_space<vmem>>, vector<1x128xf32>,
    %170 = vector.extract_strided_slice %163 {offsets = [3, 0], sizes = [1, 128], strides = [1, 1]} : vector<4x128xf32> to vector<1x128xf32>
    %c1_140 = arith.constant 1 : index
    %c384_141 = arith.constant 384 : index
    %171 = vector.load %arg11[%c1_140, %c384_141] : memref<2x512xf32, #tpu.memory_space<vmem>>, vector<1x128xf32>
    tpu.vector_store %arg11[%c1_140, %c384_141], %170 {strides = array<i32>} : memref<2x512xf32, #tpu.memory_space<vmem>>, vector<1x128xf32>,
    %c0_142 = arith.constant 0 : index
    %c0_143 = arith.constant 0 : index
    %172 = vector.load %arg11[%c0_142, %c0_143] : memref<2x512xf32, #tpu.memory_space<vmem>>, vector<2x512xf32>
    %c0_144 = arith.constant 0 : index
    %c0_145 = arith.constant 0 : index
    %173 = vector.load %arg4[%c0_144, %c0_145] : memref<512x32xf32, #tpu.memory_space<vmem>>, vector<512x32xf32>
    %cst_146 = arith.constant dense<0.000000e+00> : vector<2x32xf32>
    %174 = tpu.matmul %172, %173, %cst_146 {dimension_numbers = #tpu.dot_dimension_numbers<[1], [0], [0], [1], [0, 0, 1, 1], [], []>} : vector<2x512xf32>, vector<512x32xf32>, vector<2x32xf32> -> vector<2x32xf32>
    %c0_147 = arith.constant 0 : index
    %c0_148 = arith.constant 0 : index
    %175 = vector.load %arg5[%c0_147, %c0_148] : memref<1x32xf32, #tpu.memory_space<vmem>>, vector<1x32xf32>
    %176 = vector.broadcast %175 : vector<1x32xf32> to vector<2x32xf32>
    %177 = arith.addf %174, %176 : vector<2x32xf32>
    %cst_149 = arith.constant 0.000000e+00 : f32
    %178 = vector.broadcast %cst_149 : f32 to vector<2x32xf32>
    %179 = arith.maximumf %177, %178 : vector<2x32xf32>
    %c0_150 = arith.constant 0 : index
    %c0_151 = arith.constant 0 : index
    %180 = vector.load %arg6[%c0_150, %c0_151] : memref<32x4xf32, #tpu.memory_space<vmem>>, vector<32x4xf32>
    %cst_152 = arith.constant dense<0.000000e+00> : vector<2x4xf32>
    %181 = tpu.matmul %179, %180, %cst_152 {dimension_numbers = #tpu.dot_dimension_numbers<[1], [0], [0], [1], [0, 0, 1, 1], [], []>} : vector<2x32xf32>, vector<32x4xf32>, vector<2x4xf32> -> vector<2x4xf32>
    %c0_153 = arith.constant 0 : index
    %c0_154 = arith.constant 0 : index
    %182 = vector.load %arg7[%c0_153, %c0_154] : memref<1x4xf32, #tpu.memory_space<vmem>>, vector<1x4xf32>
    %183 = vector.broadcast %182 : vector<1x4xf32> to vector<2x4xf32>
    %184 = arith.addf %181, %183 : vector<2x4xf32>
    %cst_155 = arith.constant dense<0xFF800000> : vector<2xf32>
    %185 = vector.multi_reduction <maximumf>, %184, %cst_155 [1] : vector<2x4xf32> to vector<2xf32>
    %186 = vector.shape_cast %185 : vector<2xf32> to vector<2x1xf32>
    %187 = vector.broadcast %186 : vector<2x1xf32> to vector<2x4xf32>
    %188 = arith.subf %184, %187 : vector<2x4xf32>
    %189 = math.exp %188 : vector<2x4xf32>
    %cst_156 = arith.constant dense<0.000000e+00> : vector<2xf32>
    %190 = vector.multi_reduction <add>, %189, %cst_156 [1] : vector<2x4xf32> to vector<2xf32>
    %191 = vector.shape_cast %190 : vector<2xf32> to vector<2x1xf32>
    %192 = vector.broadcast %191 : vector<2x1xf32> to vector<2x4xf32>
    %193 = arith.divf %189, %192 : vector<2x4xf32>
    %c0_157 = arith.constant 0 : index
    %c0_158 = arith.constant 0 : index
    %194 = vector.load %arg8[%c0_157, %c0_158] : memref<2x4xf32, #tpu.memory_space<vmem>>, vector<2x4xf32>
    tpu.vector_store %arg8[%c0_157, %c0_158], %193 {strides = array<i32>} : memref<2x4xf32, #tpu.memory_space<vmem>>, vector<2x4xf32>,
    return
  }
  func.func @transform_0(%arg0: i32) -> (i32, i32) {
    %c0_i32 = arith.constant 0 : i32
    %c0_i32_0 = arith.constant 0 : i32
    %c0_i32_1 = arith.constant 0 : i32
    return %c0_i32, %c0_i32_0 : i32, i32
  }
  func.func @transform_1(%arg0: i32) -> (i32, i32) {
    %c0_i32 = arith.constant 0 : i32
    %c0_i32_0 = arith.constant 0 : i32
    %c0_i32_1 = arith.constant 0 : i32
    return %c0_i32, %c0_i32_0 : i32, i32
  }
  func.func @transform_2(%arg0: i32) -> (i32, i32) {
    %c0_i32 = arith.constant 0 : i32
    %c0_i32_0 = arith.constant 0 : i32
    %c0_i32_1 = arith.constant 0 : i32
    return %c0_i32, %c0_i32_0 : i32, i32
  }
  func.func @transform_3(%arg0: i32) -> (i32, i32) {
    %c0_i32 = arith.constant 0 : i32
    %c0_i32_0 = arith.constant 0 : i32
    %c0_i32_1 = arith.constant 0 : i32
    return %c0_i32, %c0_i32_0 : i32, i32
  }
  func.func @transform_4(%arg0: i32) -> (i32, i32) {
    %c0_i32 = arith.constant 0 : i32
    %c0_i32_0 = arith.constant 0 : i32
    %c0_i32_1 = arith.constant 0 : i32
    return %c0_i32, %c0_i32_0 : i32, i32
  }
  func.func @transform_5(%arg0: i32) -> (i32, i32) {
    %c0_i32 = arith.constant 0 : i32
    %c0_i32_0 = arith.constant 0 : i32
    %c0_i32_1 = arith.constant 0 : i32
    return %c0_i32, %c0_i32_0 : i32, i32
  }
  func.func @transform_6(%arg0: i32) -> (i32, i32) {
    %c0_i32 = arith.constant 0 : i32
    %c0_i32_0 = arith.constant 0 : i32
    %c0_i32_1 = arith.constant 0 : i32
    return %c0_i32, %c0_i32_0 : i32, i32
  }
  func.func @transform_7(%arg0: i32) -> (i32, i32) {
    %c0_i32 = arith.constant 0 : i32
    %c0_i32_0 = arith.constant 0 : i32
    %c0_i32_1 = arith.constant 0 : i32
    return %c0_i32, %c0_i32_0 : i32, i32
  }
}

</mosaic_0001>

<llo_original>
// kernel: tpu_custom_call.1
$region0: #{tpu_custom_call.1}
  #allocation0 [shape = 'u32[]', space=smem, size = 0x4, offset = 0x4, fixed_abs, tag = 'smem constant byte address 0x4 - core index']
  #allocation1 [shape = 'u32[144,128]{1,0:T(1,128)}', space=vmem, size = 0x12000, scoped, tag = 'internal scratch']
  #allocation2 [shape = 'f32[16,145]{1,0:T(8,128)}', space=vmem, size = 0x4000, scoped, tag = 'scratch operand']
  #allocation3 [shape = 'f32[289,128]{1,0:T(8,128)}', space=vmem, size = 0x25000, scoped, tag = 'scratch operand']
  #allocation4 [shape = 'f32[2,512]{1,0:T(2,128)}', space=vmem, size = 0x1000, scoped, tag = 'scratch operand']
  %s0 = inlined_call_operand.vmem [shape: f32[2,159], index: 0, kind: input, shape index: {}]
  %s1 = inlined_call_operand.vmem [shape: f32[16,16], index: 1, kind: input, shape index: {}]
  %s2 = inlined_call_operand.vmem [shape: f32[4,289], index: 2, kind: input, shape index: {}]
  %s3 = inlined_call_operand.vmem [shape: f32[512,32], index: 3, kind: input, shape index: {}]
  %s4 = inlined_call_operand.vmem [shape: f32[1,32], index: 4, kind: input, shape index: {}]
  %s5 = inlined_call_operand.vmem [shape: f32[32,4], index: 5, kind: input, shape index: {}]
  %s6 = inlined_call_operand.vmem [shape: f32[1,4], index: 6, kind: input, shape index: {}]
  %s7 = inlined_call_operand.hbm [shape: f32[2,4], index: 7, kind: output, shape index: {}]
  %s8 = sld [smem:[#allocation0]]
  $region38: #{tpu_custom_call.1} parent=0
    _
  %s10 = ssub.s32 1, %s8
  %s11 = scalar_select 0, %s10, %s8
  $region1: #{tpu_custom_call.1} parent=0
    #allocation5 [shape = 'u8[1024]{0}', space=vmem, size = 0x400, scoped, tag = 'output window, operand 0, single buffered']
    #allocation6 [shape = 's32[1]{0}', space=sflag, size = 0x4, scoped, tag = 'scoped memory for tpu_custom_call.1']
    %12 = vsyncpa [#allocation6], 0
    // Predicated region
    $region2: #{tpu_custom_call.1} parent=1 // pred_check
      _
    $region3: #{tpu_custom_call.1} parent=1 // pred_check_branch
      %14 = sbr.rel (0) target = $region5
    $region4: #{tpu_custom_call.1} parent=1 // pred_region
      _
    $region5: #{tpu_custom_call.1} parent=1 // pred_fallthru
      _
    // Predicated region
    $region6: #{tpu_custom_call.1} parent=1 // pred_check
      _
    $region7: #{tpu_custom_call.1} parent=1 // pred_check_branch
      %16 = sbr.rel (0) target = $region9
    $region8: #{tpu_custom_call.1} parent=1 // pred_region
      _
    $region9: #{tpu_custom_call.1} parent=1 // pred_fallthru
      _
    // Predicated region
    $region10: #{tpu_custom_call.1} parent=1 // pred_check
      _
    $region11: #{tpu_custom_call.1} parent=1 // pred_check_branch
      %18 = sbr.rel (0) target = $region13
    $region12: #{tpu_custom_call.1} parent=1 // pred_region
      _
    $region13: #{tpu_custom_call.1} parent=1 // pred_fallthru
      _
    // Predicated region
    $region14: #{tpu_custom_call.1} parent=1 // pred_check
      _
    $region15: #{tpu_custom_call.1} parent=1 // pred_check_branch
      %20 = sbr.rel (0) target = $region17
    $region16: #{tpu_custom_call.1} parent=1 // pred_region
      _
    $region17: #{tpu_custom_call.1} parent=1 // pred_fallthru
      _
    // Predicated region
    $region18: #{tpu_custom_call.1} parent=1 // pred_check
      _
    $region19: #{tpu_custom_call.1} parent=1 // pred_check_branch
      %22 = sbr.rel (0) target = $region21
    $region20: #{tpu_custom_call.1} parent=1 // pred_region
      _
    $region21: #{tpu_custom_call.1} parent=1 // pred_fallthru
      _
    // Predicated region
    $region22: #{tpu_custom_call.1} parent=1 // pred_check
      _
    $region23: #{tpu_custom_call.1} parent=1 // pred_check_branch
      %24 = sbr.rel (0) target = $region25
    $region24: #{tpu_custom_call.1} parent=1 // pred_region
      _
    $region25: #{tpu_custom_call.1} parent=1 // pred_fallthru
      _
    // Predicated region
    $region26: #{tpu_custom_call.1} parent=1 // pred_check
      _
    $region27: #{tpu_custom_call.1} parent=1 // pred_check_branch
      %26 = sbr.rel (0) target = $region29
    $region28: #{tpu_custom_call.1} parent=1 // pred_region
      _
    $region29: #{tpu_custom_call.1} parent=1 // pred_fallthru
      _
    %v27 = vlaneseq
    %vm28 = vcmp.ge.s32.totalorder %v27, 0
    %vm29 = vcmp.lt.s32.totalorder %v27, 145
    %vm30 = vmand %vm28, %vm29
    %s31 = scalar_lea.vmem [#allocation2], 23
    %32 = vst.msk [vmem:[%s31] ss:$8 sm:$0x3] %vm30, 1.0
    %33 = vst.msk [vmem:[%s31] ss:$8 sm:$0x0] %vm30, 1.0
    %34 = vst [vmem:[#allocation3 + $0x120] sm:$0x1] 1.0
    %v35 = vld [vmem:[%s1] sm:$0xff]
    %v36 = vld [vmem:[%s1 + $0x8] sm:$0xff]
    %v37 = vld [vmem:[%s2] sm:$0xff]
    %v38 = vld [vmem:[%s2 + $0x8] sm:$0xf]
    %v39 = vld [vmem:[%s0] ss:$2 sm:$0x3]
    %40 = vst.msk [vmem:[#allocation2] ss:$8 sm:$0x3] %vm30, %v39
    %41 = vst.msk [vmem:[#allocation2] ss:$8 sm:$0x0] %vm30, %v39
    %43 = vrot.lane.b32.xlu0 %v39, 127
    %v44 = vpop.permute.xlu0 %43
    %v45 = vrot.slane %v44, 1
    %vm46 = vcmask 1039360
    %v47 = vsel %vm46, %v44, %v45
    %s49 = scalar_lea.vmem [#allocation2], 1
    %50 = vst.msk [vmem:[%s49] ss:$8 sm:$0x3] %vm30, %v47
    %51 = vst.msk [vmem:[%s49] ss:$8 sm:$0x0] %vm30, %v47
    %52 = vrot.lane.b32.xlu0 %v39, 126
    %v53 = vpop.permute.xlu0 %52
    %v54 = vrot.slane %v53, 1
    %vm55 = vcmask 1031168
    %v56 = vsel %vm55, %v53, %v54
    %s58 = scalar_lea.vmem [#allocation2], 2
    %59 = vst.msk [vmem:[%s58] ss:$8 sm:$0x3] %vm30, %v56
    %60 = vst.msk [vmem:[%s58] ss:$8 sm:$0x0] %vm30, %v56
    %61 = vrot.lane.b32.xlu0 %v39, 125
    %v62 = vpop.permute.xlu0 %61
    %v63 = vrot.slane %v62, 1
    %vm64 = vcmask 1022976
    %v65 = vsel %vm64, %v62, %v63
    %s67 = scalar_lea.vmem [#allocation2], 3
    %68 = vst.msk [vmem:[%s67] ss:$8 sm:$0x3] %vm30, %v65
    %69 = vst.msk [vmem:[%s67] ss:$8 sm:$0x0] %vm30, %v65
    %70 = vrot.lane.b32.xlu0 %v39, 124
    %v71 = vpop.permute.xlu0 %70
    %v72 = vrot.slane %v71, 1
    %vm73 = vcmask 1014784
    %v74 = vsel %vm73, %v71, %v72
    %s76 = scalar_lea.vmem [#allocation2], 4
    %77 = vst.msk [vmem:[%s76] ss:$8 sm:$0x3] %vm30, %v74
    %78 = vst.msk [vmem:[%s76] ss:$8 sm:$0x0] %vm30, %v74
    %79 = vrot.lane.b32.xlu0 %v39, 123
    %v80 = vpop.permute.xlu0 %79
    %v81 = vrot.slane %v80, 1
    %vm82 = vcmask 1006592
    %v83 = vsel %vm82, %v80, %v81
    %s85 = scalar_lea.vmem [#allocation2], 5
    %86 = vst.msk [vmem:[%s85] ss:$8 sm:$0x3] %vm30, %v83
    %87 = vst.msk [vmem:[%s85] ss:$8 sm:$0x0] %vm30, %v83
    %88 = vrot.lane.b32.xlu0 %v39, 122
    %v89 = vpop.permute.xlu0 %88
    %v90 = vrot.slane %v89, 1
    %vm91 = vcmask 998400
    %v92 = vsel %vm91, %v89, %v90
    %s94 = scalar_lea.vmem [#allocation2], 6
    %95 = vst.msk [vmem:[%s94] ss:$8 sm:$0x3] %vm30, %v92
    %96 = vst.msk [vmem:[%s94] ss:$8 sm:$0x0] %vm30, %v92
    %97 = vrot.lane.b32.xlu0 %v39, 121
    %v98 = vpop.permute.xlu0 %97
    %v99 = vrot.slane %v98, 1
    %vm100 = vcmask 990208
    %v101 = vsel %vm100, %v98, %v99
    %s103 = scalar_lea.vmem [#allocation2], 7
    %104 = vst.msk [vmem:[%s103] ss:$8 sm:$0x3] %vm30, %v101
    %105 = vst.msk [vmem:[%s103] ss:$8 sm:$0x0] %vm30, %v101
    %106 = vrot.lane.b32.xlu0 %v39, 120
    %v107 = vpop.permute.xlu0 %106
    %v108 = vrot.slane %v107, 1
    %vm109 = vcmask 982016
    %v110 = vsel %vm109, %v107, %v108
    %s112 = scalar_lea.vmem [#allocation2], 16
    %113 = vst.msk [vmem:[%s112] ss:$8 sm:$0x3] %vm30, %v110
    %114 = vst.msk [vmem:[%s112] ss:$8 sm:$0x0] %vm30, %v110
    %115 = vrot.lane.b32.xlu0 %v39, 119
    %v116 = vpop.permute.xlu0 %115
    %v117 = vrot.slane %v116, 1
    %vm118 = vcmask 973824
    %v119 = vsel %vm118, %v116, %v117
    %s121 = scalar_lea.vmem [#allocation2], 17
    %122 = vst.msk [vmem:[%s121] ss:$8 sm:$0x3] %vm30, %v119
    %123 = vst.msk [vmem:[%s121] ss:$8 sm:$0x0] %vm30, %v119
    %124 = vrot.lane.b32.xlu0 %v39, 118
    %v125 = vpop.permute.xlu0 %124
    %v126 = vrot.slane %v125, 1
    %vm127 = vcmask 965632
    %v128 = vsel %vm127, %v125, %v126
    %s130 = scalar_lea.vmem [#allocation2], 18
    %131 = vst.msk [vmem:[%s130] ss:$8 sm:$0x3] %vm30, %v128
    %132 = vst.msk [vmem:[%s130] ss:$8 sm:$0x0] %vm30, %v128
    %133 = vrot.lane.b32.xlu0 %v39, 117
    %v134 = vpop.permute.xlu0 %133
    %v135 = vrot.slane %v134, 1
    %vm136 = vcmask 957440
    %v137 = vsel %vm136, %v134, %v135
    %s139 = scalar_lea.vmem [#allocation2], 19
    %140 = vst.msk [vmem:[%s139] ss:$8 sm:$0x3] %vm30, %v137
    %141 = vst.msk [vmem:[%s139] ss:$8 sm:$0x0] %vm30, %v137
    %142 = vrot.lane.b32.xlu0 %v39, 116
    %v143 = vpop.permute.xlu0 %142
    %v144 = vrot.slane %v143, 1
    %vm145 = vcmask 949248
    %v146 = vsel %vm145, %v143, %v144
    %s148 = scalar_lea.vmem [#allocation2], 20
    %149 = vst.msk [vmem:[%s148] ss:$8 sm:$0x3] %vm30, %v146
    %150 = vst.msk [vmem:[%s148] ss:$8 sm:$0x0] %vm30, %v146
    %151 = vrot.lane.b32.xlu0 %v39, 115
    %v152 = vpop.permute.xlu0 %151
    %v153 = vrot.slane %v152, 1
    %vm154 = vcmask 941056
    %v155 = vsel %vm154, %v152, %v153
    %s157 = scalar_lea.vmem [#allocation2], 21
    %158 = vst.msk [vmem:[%s157] ss:$8 sm:$0x3] %vm30, %v155
    %159 = vst.msk [vmem:[%s157] ss:$8 sm:$0x0] %vm30, %v155
    %160 = vrot.lane.b32.xlu0 %v39, 114
    %v161 = vpop.permute.xlu0 %160
    %v162 = vrot.slane %v161, 1
    %vm163 = vcmask 932864
    %v164 = vsel %vm163, %v161, %v162
    %s166 = scalar_lea.vmem [#allocation2], 22
    %167 = vst.msk [vmem:[%s166] ss:$8 sm:$0x3] %vm30, %v164
    %168 = vst.msk [vmem:[%s166] ss:$8 sm:$0x0] %vm30, %v164
    %v169 = vld [vmem:[#allocation2] sm:$0xff]
    %v170 = vld [vmem:[#allocation2 + $0x8] sm:$0xff]
    %v171 = vld [vmem:[#allocation2 + $0x10] sm:$0xff]
    %v172 = vld [vmem:[#allocation2 + $0x18] sm:$0xff]
    %vm173 = vcmask 130048
    %v175 = vsel %vm173, %v35, 0
    %v178 = vsel %vm173, %v36, 0
    %180 = vmatprep.subr.mxu0 %v170
    %181 = vmatpush1.msra.mxu0 %v169
    %182 = vmatprep.subr.mxu0 %v172
    %183 = vmatpush1.msra.mxu0 %v171
    %184 = vmatprep.subr.mxu0 0.0
    %185 = vmatpush1.msra.mxu0 0.0
    %186 = vmatprep.subr.mxu0 0.0
    %187 = vmatpush1.msra.mxu0 0.0
    %188 = vmatprep.subr.mxu0 0.0
    %189 = vmatpush1.msra.mxu0 0.0
    %190 = vmatprep.subr.mxu0 0.0
    %191 = vmatpush1.msra.mxu0 0.0
    %192 = vmatprep.subr.mxu0 0.0
    %193 = vmatpush1.msra.mxu0 0.0
    %194 = vmatprep.subr.mxu0 0.0
    %195 = vmatpush1.msra.mxu0 0.0
    %196 = vmatprep.subr.mxu0 0.0
    %197 = vmatpush1.msra.mxu0 0.0
    %198 = vmatprep.subr.mxu0 0.0
    %199 = vmatpush1.msra.mxu0 0.0
    %200 = vmatprep.subr.mxu0 0.0
    %201 = vmatpush1.msra.mxu0 0.0
    %202 = vmatprep.subr.mxu0 0.0
    %203 = vmatpush1.msra.mxu0 0.0
    %204 = vmatprep.subr.mxu0 0.0
    %205 = vmatpush1.msra.mxu0 0.0
    %206 = vmatprep.subr.mxu0 0.0
    %207 = vmatpush1.msra.mxu0 0.0
    %208 = vmatprep.subr.mxu0 0.0
    %209 = vmatpush1.msra.mxu0 0.0
    %210 = vmatprep.subr.mxu0 0.0
    %211 = vmatpush1.msra.mxu0 0.0
    %212 = vmatprep.subr.mxu0 0.0
    %213 = vmatpush1.msra.mxu0 0.0
    %214 = vmatprep.subr.mxu0 0.0
    %215 = vmatpush1.msra.mxu0 0.0
    %216 = vmatprep.subr.mxu0 0.0
    %217 = vmatpush1.msra.mxu0 0.0
    %218 = vmatprep.subr.mxu0 0.0
    %219 = vmatpush1.msra.mxu0 0.0
    %220 = vmatprep.subr.mxu0 0.0
    %221 = vmatpush1.msra.mxu0 0.0
    %222 = vmatprep.subr.mxu0 0.0
    %223 = vmatpush1.msra.mxu0 0.0
    %224 = vmatprep.subr.mxu0 0.0
    %225 = vmatpush1.msra.mxu0 0.0
    %226 = vmatprep.subr.mxu0 0.0
    %227 = vmatpush1.msra.mxu0 0.0
    %228 = vmatprep.subr.mxu0 0.0
    %229 = vmatpush1.msra.mxu0 0.0
    %230 = vmatprep.subr.mxu0 0.0
    %231 = vmatpush1.msra.mxu0 0.0
    %232 = vmatprep.subr.mxu0 0.0
    %233 = vmatpush1.msra.mxu0 0.0
    %234 = vmatprep.subr.mxu0 0.0
    %235 = vmatpush1.msra.mxu0 0.0
    %236 = vmatprep.subr.mxu0 0.0
    %237 = vmatpush1.msra.mxu0 0.0
    %238 = vmatprep.subr.mxu0 0.0
    %239 = vmatpush1.msra.mxu0 0.0
    %240 = vmatprep.subr.mxu0 0.0
    %241 = vmatpush1.msra.mxu0 0.0
    %242 = vmatprep.subr.mxu0 0.0
    %243 = vmatpush1.msra.mxu0 0.0
    %244 = vmatprep.mubr.f32.mxu0 0.0
    %245 = vmatmul.mubr.f32.gmra.mrb[0].mxu0 %v175
    %v246 = vpop.f32.mrb[0].mxu0
    %v247 = vadd.f32 0.0, %v246
    %v248 = vpop.f32.mrb[0].mxu0
    %v249 = vadd.f32 0.0, %v248
    %250 = vmatprep.mubr.f32.mxu0 0.0
    %251 = vmatmul.mubr.f32.gmra.mrb[0].mxu0 %v178
    %v252 = vpop.f32.mrb[0].mxu0
    %v253 = vadd.f32 0.0, %v252
    %v254 = vpop.f32.mrb[0].mxu0
    %v255 = vadd.f32 0.0, %v254
    %256 = vdwg.mxu0
    %v257 = vmax.f32 %v247, 0.0
    %v258 = vmax.f32 %v249, 0.0
    %v259 = vmax.f32 %v253, 0.0
    %v260 = vmax.f32 %v255, 0.0
    %261 = vst [vmem:[#allocation3] sm:$0xff] %v257
    %262 = vst [vmem:[#allocation3 + $0x8] sm:$0xff] %v259
    %267 = vrot.lane.b32.xlu0 %v257, 127
    %v268 = vpop.permute.xlu0 %267
    %269 = vrot.lane.b32.xlu0 %v258, 127
    %v270 = vpop.permute.xlu0 %269
    %271 = vrot.lane.b32.xlu0 %v259, 127
    %v272 = vpop.permute.xlu0 %271
    %273 = vrot.lane.b32.xlu0 %v260, 127
    %v274 = vpop.permute.xlu0 %273
    %v275 = vsel %vm46, %v268, %v270
    %v276 = vsel %vm46, %v272, %v274
    %279 = vst [vmem:[#allocation3 + $0x10] sm:$0xff] %v275
    %280 = vst [vmem:[#allocation3 + $0x18] sm:$0xff] %v276
    %281 = vrot.lane.b32.xlu0 %v257, 126
    %v282 = vpop.permute.xlu0 %281
    %283 = vrot.lane.b32.xlu0 %v258, 126
    %v284 = vpop.permute.xlu0 %283
    %285 = vrot.lane.b32.xlu0 %v259, 126
    %v286 = vpop.permute.xlu0 %285
    %287 = vrot.lane.b32.xlu0 %v260, 126
    %v288 = vpop.permute.xlu0 %287
    %v289 = vsel %vm55, %v282, %v284
    %v290 = vsel %vm55, %v286, %v288
    %293 = vst [vmem:[#allocation3 + $0x20] sm:$0xff] %v289
    %294 = vst [vmem:[#allocation3 + $0x28] sm:$0xff] %v290
    %295 = vrot.lane.b32.xlu0 %v257, 125
    %v296 = vpop.permute.xlu0 %295
    %297 = vrot.lane.b32.xlu0 %v258, 125
    %v298 = vpop.permute.xlu0 %297
    %299 = vrot.lane.b32.xlu0 %v259, 125
    %v300 = vpop.permute.xlu0 %299
    %301 = vrot.lane.b32.xlu0 %v260, 125
    %v302 = vpop.permute.xlu0 %301
    %v303 = vsel %vm64, %v296, %v298
    %v304 = vsel %vm64, %v300, %v302
    %307 = vst [vmem:[#allocation3 + $0x30] sm:$0xff] %v303
    %308 = vst [vmem:[#allocation3 + $0x38] sm:$0xff] %v304
    %309 = vrot.lane.b32.xlu0 %v257, 124
    %v310 = vpop.permute.xlu0 %309
    %311 = vrot.lane.b32.xlu0 %v258, 124
    %v312 = vpop.permute.xlu0 %311
    %313 = vrot.lane.b32.xlu0 %v259, 124
    %v314 = vpop.permute.xlu0 %313
    %315 = vrot.lane.b32.xlu0 %v260, 124
    %v316 = vpop.permute.xlu0 %315
    %v317 = vsel %vm73, %v310, %v312
    %v318 = vsel %vm73, %v314, %v316
    %321 = vst [vmem:[#allocation3 + $0x40] sm:$0xff] %v317
    %322 = vst [vmem:[#allocation3 + $0x48] sm:$0xff] %v318
    %323 = vrot.lane.b32.xlu0 %v257, 123
    %v324 = vpop.permute.xlu0 %323
    %325 = vrot.lane.b32.xlu0 %v258, 123
    %v326 = vpop.permute.xlu0 %325
    %327 = vrot.lane.b32.xlu0 %v259, 123
    %v328 = vpop.permute.xlu0 %327
    %329 = vrot.lane.b32.xlu0 %v260, 123
    %v330 = vpop.permute.xlu0 %329
    %v331 = vsel %vm82, %v324, %v326
    %v332 = vsel %vm82, %v328, %v330
    %335 = vst [vmem:[#allocation3 + $0x50] sm:$0xff] %v331
    %336 = vst [vmem:[#allocation3 + $0x58] sm:$0xff] %v332
    %337 = vrot.lane.b32.xlu0 %v257, 122
    %v338 = vpop.permute.xlu0 %337
    %339 = vrot.lane.b32.xlu0 %v258, 122
    %v340 = vpop.permute.xlu0 %339
    %341 = vrot.lane.b32.xlu0 %v259, 122
    %v342 = vpop.permute.xlu0 %341
    %343 = vrot.lane.b32.xlu0 %v260, 122
    %v344 = vpop.permute.xlu0 %343
    %v345 = vsel %vm91, %v338, %v340
    %v346 = vsel %vm91, %v342, %v344
    %349 = vst [vmem:[#allocation3 + $0x60] sm:$0xff] %v345
    %350 = vst [vmem:[#allocation3 + $0x68] sm:$0xff] %v346
    %351 = vrot.lane.b32.xlu0 %v257, 121
    %v352 = vpop.permute.xlu0 %351
    %353 = vrot.lane.b32.xlu0 %v258, 121
    %v354 = vpop.permute.xlu0 %353
    %355 = vrot.lane.b32.xlu0 %v259, 121
    %v356 = vpop.permute.xlu0 %355
    %357 = vrot.lane.b32.xlu0 %v260, 121
    %v358 = vpop.permute.xlu0 %357
    %v359 = vsel %vm100, %v352, %v354
    %v360 = vsel %vm100, %v356, %v358
    %363 = vst [vmem:[#allocation3 + $0x70] sm:$0xff] %v359
    %364 = vst [vmem:[#allocation3 + $0x78] sm:$0xff] %v360
    %365 = vrot.lane.b32.xlu0 %v257, 120
    %v366 = vpop.permute.xlu0 %365
    %367 = vrot.lane.b32.xlu0 %v258, 120
    %v368 = vpop.permute.xlu0 %367
    %369 = vrot.lane.b32.xlu0 %v259, 120
    %v370 = vpop.permute.xlu0 %369
    %371 = vrot.lane.b32.xlu0 %v260, 120
    %v372 = vpop.permute.xlu0 %371
    %v373 = vsel %vm109, %v366, %v368
    %v374 = vsel %vm109, %v370, %v372
    %377 = vst [vmem:[#allocation3 + $0x80] sm:$0xff] %v373
    %378 = vst [vmem:[#allocation3 + $0x88] sm:$0xff] %v374
    %379 = vrot.lane.b32.xlu0 %v257, 119
    %v380 = vpop.permute.xlu0 %379
    %381 = vrot.lane.b32.xlu0 %v258, 119
    %v382 = vpop.permute.xlu0 %381
    %383 = vrot.lane.b32.xlu0 %v259, 119
    %v384 = vpop.permute.xlu0 %383
    %385 = vrot.lane.b32.xlu0 %v260, 119
    %v386 = vpop.permute.xlu0 %385
    %v387 = vsel %vm118, %v380, %v382
    %v388 = vsel %vm118, %v384, %v386
    %391 = vst [vmem:[#allocation3 + $0x90] sm:$0xff] %v387
    %392 = vst [vmem:[#allocation3 + $0x98] sm:$0xff] %v388
    %393 = vrot.lane.b32.xlu0 %v257, 118
    %v394 = vpop.permute.xlu0 %393
    %395 = vrot.lane.b32.xlu0 %v258, 118
    %v396 = vpop.permute.xlu0 %395
    %397 = vrot.lane.b32.xlu0 %v259, 118
    %v398 = vpop.permute.xlu0 %397
    %399 = vrot.lane.b32.xlu0 %v260, 118
    %v400 = vpop.permute.xlu0 %399
    %v401 = vsel %vm127, %v394, %v396
    %v402 = vsel %vm127, %v398, %v400
    %405 = vst [vmem:[#allocation3 + $0xa0] sm:$0xff] %v401
    %406 = vst [vmem:[#allocation3 + $0xa8] sm:$0xff] %v402
    %407 = vrot.lane.b32.xlu0 %v257, 117
    %v408 = vpop.permute.xlu0 %407
    %409 = vrot.lane.b32.xlu0 %v258, 117
    %v410 = vpop.permute.xlu0 %409
    %411 = vrot.lane.b32.xlu0 %v259, 117
    %v412 = vpop.permute.xlu0 %411
    %413 = vrot.lane.b32.xlu0 %v260, 117
    %v414 = vpop.permute.xlu0 %413
    %v415 = vsel %vm136, %v408, %v410
    %v416 = vsel %vm136, %v412, %v414
    %419 = vst [vmem:[#allocation3 + $0xb0] sm:$0xff] %v415
    %420 = vst [vmem:[#allocation3 + $0xb8] sm:$0xff] %v416
    %421 = vrot.lane.b32.xlu0 %v257, 116
    %v422 = vpop.permute.xlu0 %421
    %423 = vrot.lane.b32.xlu0 %v258, 116
    %v424 = vpop.permute.xlu0 %423
    %425 = vrot.lane.b32.xlu0 %v259, 116
    %v426 = vpop.permute.xlu0 %425
    %427 = vrot.lane.b32.xlu0 %v260, 116
    %v428 = vpop.permute.xlu0 %427
    %v429 = vsel %vm145, %v422, %v424
    %v430 = vsel %vm145, %v426, %v428
    %433 = vst [vmem:[#allocation3 + $0xc0] sm:$0xff] %v429
    %434 = vst [vmem:[#allocation3 + $0xc8] sm:$0xff] %v430
    %435 = vrot.lane.b32.xlu0 %v257, 115
    %v436 = vpop.permute.xlu0 %435
    %437 = vrot.lane.b32.xlu0 %v258, 115
    %v438 = vpop.permute.xlu0 %437
    %439 = vrot.lane.b32.xlu0 %v259, 115
    %v440 = vpop.permute.xlu0 %439
    %441 = vrot.lane.b32.xlu0 %v260, 115
    %v442 = vpop.permute.xlu0 %441
    %v443 = vsel %vm154, %v436, %v438
    %v444 = vsel %vm154, %v440, %v442
    %447 = vst [vmem:[#allocation3 + $0xd0] sm:$0xff] %v443
    %448 = vst [vmem:[#allocation3 + $0xd8] sm:$0xff] %v444
    %449 = vrot.lane.b32.xlu0 %v257, 114
    %v450 = vpop.permute.xlu0 %449
    %451 = vrot.lane.b32.xlu0 %v258, 114
    %v452 = vpop.permute.xlu0 %451
    %453 = vrot.lane.b32.xlu0 %v259, 114
    %v454 = vpop.permute.xlu0 %453
    %455 = vrot.lane.b32.xlu0 %v260, 114
    %v456 = vpop.permute.xlu0 %455
    %v457 = vsel %vm163, %v450, %v452
    %v458 = vsel %vm163, %v454, %v456
    %461 = vst [vmem:[#allocation3 + $0xe0] sm:$0xff] %v457
    %462 = vst [vmem:[#allocation3 + $0xe8] sm:$0xff] %v458
    %463 = vrot.lane.b32.xlu0 %v257, 113
    %v464 = vpop.permute.xlu0 %463
    %465 = vrot.lane.b32.xlu0 %v258, 113
    %v466 = vpop.permute.xlu0 %465
    %467 = vrot.lane.b32.xlu0 %v259, 113
    %v468 = vpop.permute.xlu0 %467
    %469 = vrot.lane.b32.xlu0 %v260, 113
    %v470 = vpop.permute.xlu0 %469
    %vm471 = vcmask 924672
    %v472 = vsel %vm471, %v464, %v466
    %v473 = vsel %vm471, %v468, %v470
    %476 = vst [vmem:[#allocation3 + $0xf0] sm:$0xff] %v472
    %477 = vst [vmem:[#allocation3 + $0xf8] sm:$0xff] %v473
    %478 = vrot.lane.b32.xlu0 %v257, 112
    %v479 = vpop.permute.xlu0 %478
    %480 = vrot.lane.b32.xlu0 %v258, 112
    %v481 = vpop.permute.xlu0 %480
    %482 = vrot.lane.b32.xlu0 %v259, 112
    %v483 = vpop.permute.xlu0 %482
    %484 = vrot.lane.b32.xlu0 %v260, 112
    %v485 = vpop.permute.xlu0 %484
    %vm486 = vcmask 916480
    %v487 = vsel %vm486, %v479, %v481
    %v488 = vsel %vm486, %v483, %v485
    %491 = vst [vmem:[#allocation3 + $0x100] sm:$0xff] %v487
    %492 = vst [vmem:[#allocation3 + $0x108] sm:$0xff] %v488
    %493 = vrot.lane.b32.xlu0 %v257, 111
    %v494 = vpop.permute.xlu0 %493
    %495 = vrot.lane.b32.xlu0 %v258, 111
    %v496 = vpop.permute.xlu0 %495
    %497 = vrot.lane.b32.xlu0 %v259, 111
    %v498 = vpop.permute.xlu0 %497
    %499 = vrot.lane.b32.xlu0 %v260, 111
    %v500 = vpop.permute.xlu0 %499
    %vm501 = vcmask 908288
    %v502 = vsel %vm501, %v494, %v496
    %v503 = vsel %vm501, %v498, %v500
    %506 = vst [vmem:[#allocation3 + $0x110] sm:$0xff] %v502
    %507 = vst [vmem:[#allocation3 + $0x118] sm:$0xff] %v503
    %v508 = vld [vmem:[#allocation3] sm:$0xff]
    %v509 = vld [vmem:[#allocation3 + $0x8] sm:$0xff]
    %v510 = vld [vmem:[#allocation3 + $0x10] sm:$0xff]
    %v511 = vld [vmem:[#allocation3 + $0x18] sm:$0xff]
    %v512 = vld [vmem:[#allocation3 + $0x20] sm:$0xff]
    %v513 = vld [vmem:[#allocation3 + $0x28] sm:$0xff]
    %v514 = vld [vmem:[#allocation3 + $0x30] sm:$0xff]
    %v515 = vld [vmem:[#allocation3 + $0x38] sm:$0xff]
    %v516 = vld [vmem:[#allocation3 + $0x40] sm:$0xff]
    %v517 = vld [vmem:[#allocation3 + $0x48] sm:$0xff]
    %v518 = vld [vmem:[#allocation3 + $0x50] sm:$0xff]
    %v519 = vld [vmem:[#allocation3 + $0x58] sm:$0xff]
    %v520 = vld [vmem:[#allocation3 + $0x60] sm:$0xff]
    %v521 = vld [vmem:[#allocation3 + $0x68] sm:$0xff]
    %v522 = vld [vmem:[#allocation3 + $0x70] sm:$0xff]
    %v523 = vld [vmem:[#allocation3 + $0x78] sm:$0xff]
    %v524 = vld [vmem:[#allocation3 + $0x80] sm:$0xff]
    %v525 = vld [vmem:[#allocation3 + $0x88] sm:$0xff]
    %v526 = vld [vmem:[#allocation3 + $0x90] sm:$0xff]
    %v527 = vld [vmem:[#allocation3 + $0x98] sm:$0xff]
    %v528 = vld [vmem:[#allocation3 + $0xa0] sm:$0xff]
    %v529 = vld [vmem:[#allocation3 + $0xa8] sm:$0xff]
    %v530 = vld [vmem:[#allocation3 + $0xb0] sm:$0xff]
    %v531 = vld [vmem:[#allocation3 + $0xb8] sm:$0xff]
    %v532 = vld [vmem:[#allocation3 + $0xc0] sm:$0xff]
    %v533 = vld [vmem:[#allocation3 + $0xc8] sm:$0xff]
    %v534 = vld [vmem:[#allocation3 + $0xd0] sm:$0xff]
    %v535 = vld [vmem:[#allocation3 + $0xd8] sm:$0xff]
    %v536 = vld [vmem:[#allocation3 + $0xe0] sm:$0xff]
    %v537 = vld [vmem:[#allocation3 + $0xe8] sm:$0xff]
    %v538 = vld [vmem:[#allocation3 + $0xf0] sm:$0xff]
    %v539 = vld [vmem:[#allocation3 + $0xf8] sm:$0xff]
    %v540 = vld [vmem:[#allocation3 + $0x100] sm:$0xff]
    %v541 = vld [vmem:[#allocation3 + $0x108] sm:$0xff]
    %v542 = vld [vmem:[#allocation3 + $0x110] sm:$0xff]
    %v543 = vld [vmem:[#allocation3 + $0x118] sm:$0xff]
    %v544 = vld [vmem:[#allocation3 + $0x120] sm:$0x1]
    %v547 = vcombine.high %v37, %v37
    %vm549 = vcmask 269312
    %v550 = vsel %vm549, %v38, 0
    %vm552 = vcmask 1040384
    %v554 = vsel %vm552, %v544, 0
    %556 = vmatprep.subr.mxu0 0.0
    %557 = vmatpush1.msra.mxu0 %v508
    %558 = vmatprep.subr.mxu0 0.0
    %559 = vmatpush1.msra.mxu0 %v509
    %560 = vmatprep.subr.mxu0 0.0
    %561 = vmatpush1.msra.mxu0 %v510
    %562 = vmatprep.subr.mxu0 0.0
    %563 = vmatpush1.msra.mxu0 %v511
    %564 = vmatprep.subr.mxu0 0.0
    %565 = vmatpush1.msra.mxu0 %v512
    %566 = vmatprep.subr.mxu0 0.0
    %567 = vmatpush1.msra.mxu0 %v513
    %568 = vmatprep.subr.mxu0 0.0
    %569 = vmatpush1.msra.mxu0 %v514
    %570 = vmatprep.subr.mxu0 0.0
    %571 = vmatpush1.msra.mxu0 %v515
    %572 = vmatprep.subr.mxu0 0.0
    %573 = vmatpush1.msra.mxu0 %v516
    %574 = vmatprep.subr.mxu0 0.0
    %575 = vmatpush1.msra.mxu0 %v517
    %576 = vmatprep.subr.mxu0 0.0
    %577 = vmatpush1.msra.mxu0 %v518
    %578 = vmatprep.subr.mxu0 0.0
    %579 = vmatpush1.msra.mxu0 %v519
    %580 = vmatprep.subr.mxu0 0.0
    %581 = vmatpush1.msra.mxu0 %v520
    %582 = vmatprep.subr.mxu0 0.0
    %583 = vmatpush1.msra.mxu0 %v521
    %584 = vmatprep.subr.mxu0 0.0
    %585 = vmatpush1.msra.mxu0 %v522
    %586 = vmatprep.subr.mxu0 0.0
    %587 = vmatpush1.msra.mxu0 %v523
    %588 = vmatprep.subr.mxu0 0.0
    %589 = vmatpush1.msra.mxu0 %v524
    %590 = vmatprep.subr.mxu0 0.0
    %591 = vmatpush1.msra.mxu0 %v525
    %592 = vmatprep.subr.mxu0 0.0
    %593 = vmatpush1.msra.mxu0 %v526
    %594 = vmatprep.subr.mxu0 0.0
    %595 = vmatpush1.msra.mxu0 %v527
    %596 = vmatprep.subr.mxu0 0.0
    %597 = vmatpush1.msra.mxu0 %v528
    %598 = vmatprep.subr.mxu0 0.0
    %599 = vmatpush1.msra.mxu0 %v529
    %600 = vmatprep.subr.mxu0 0.0
    %601 = vmatpush1.msra.mxu0 %v530
    %602 = vmatprep.subr.mxu0 0.0
    %603 = vmatpush1.msra.mxu0 %v531
    %604 = vmatprep.subr.mxu0 0.0
    %605 = vmatpush1.msra.mxu0 %v532
    %606 = vmatprep.subr.mxu0 0.0
    %607 = vmatpush1.msra.mxu0 %v533
    %608 = vmatprep.subr.mxu0 0.0
    %609 = vmatpush1.msra.mxu0 %v534
    %610 = vmatprep.subr.mxu0 0.0
    %611 = vmatpush1.msra.mxu0 %v535
    %612 = vmatprep.subr.mxu0 0.0
    %613 = vmatpush1.msra.mxu0 %v536
    %614 = vmatprep.subr.mxu0 0.0
    %615 = vmatpush1.msra.mxu0 %v537
    %616 = vmatprep.subr.mxu0 0.0
    %617 = vmatpush1.msra.mxu0 %v538
    %618 = vmatprep.subr.mxu0 0.0
    %619 = vmatpush1.msra.mxu0 %v539
    %620 = vmatprep.mubr.f32.mxu0 %v547
    %621 = vmatmul.mubr.f32.gmra.mrb[0].mxu0 %v37
    %v622 = vpop.f32.mrb[0].mxu0
    %v623 = vadd.f32 0.0, %v622
    %v624 = vpop.f32.mrb[0].mxu0
    %625 = vdwg.mxu0
    %626 = vmatprep.subr.mxu0 0.0
    %627 = vmatpush1.msra.mxu0 %v540
    %628 = vmatprep.subr.mxu0 0.0
    %629 = vmatpush1.msra.mxu0 %v541
    %630 = vmatprep.subr.mxu0 0.0
    %631 = vmatpush1.msra.mxu0 %v542
    %632 = vmatprep.subr.mxu0 0.0
    %633 = vmatpush1.msra.mxu0 %v543
    %634 = vmatprep.subr.mxu0 0.0
    %635 = vmatpush1.msra.mxu0 %v554
    %636 = vmatprep.subr.mxu0 0.0
    %637 = vmatpush1.msra.mxu0 0.0
    %638 = vmatprep.subr.mxu0 0.0
    %639 = vmatpush1.msra.mxu0 0.0
    %640 = vmatprep.subr.mxu0 0.0
    %641 = vmatpush1.msra.mxu0 0.0
    %642 = vmatprep.subr.mxu0 0.0
    %643 = vmatpush1.msra.mxu0 0.0
    %644 = vmatprep.subr.mxu0 0.0
    %645 = vmatpush1.msra.mxu0 0.0
    %646 = vmatprep.subr.mxu0 0.0
    %647 = vmatpush1.msra.mxu0 0.0
    %648 = vmatprep.subr.mxu0 0.0
    %649 = vmatpush1.msra.mxu0 0.0
    %650 = vmatprep.subr.mxu0 0.0
    %651 = vmatpush1.msra.mxu0 0.0
    %652 = vmatprep.subr.mxu0 0.0
    %653 = vmatpush1.msra.mxu0 0.0
    %654 = vmatprep.subr.mxu0 0.0
    %655 = vmatpush1.msra.mxu0 0.0
    %656 = vmatprep.subr.mxu0 0.0
    %657 = vmatpush1.msra.mxu0 0.0
    %658 = vmatprep.subr.mxu0 0.0
    %659 = vmatpush1.msra.mxu0 0.0
    %660 = vmatprep.subr.mxu0 0.0
    %661 = vmatpush1.msra.mxu0 0.0
    %662 = vmatprep.subr.mxu0 0.0
    %663 = vmatpush1.msra.mxu0 0.0
    %664 = vmatprep.subr.mxu0 0.0
    %665 = vmatpush1.msra.mxu0 0.0
    %666 = vmatprep.subr.mxu0 0.0
    %667 = vmatpush1.msra.mxu0 0.0
    %668 = vmatprep.subr.mxu0 0.0
    %669 = vmatpush1.msra.mxu0 0.0
    %670 = vmatprep.subr.mxu0 0.0
    %671 = vmatpush1.msra.mxu0 0.0
    %672 = vmatprep.subr.mxu0 0.0
    %673 = vmatpush1.msra.mxu0 0.0
    %674 = vmatprep.subr.mxu0 0.0
    %675 = vmatpush1.msra.mxu0 0.0
    %676 = vmatprep.subr.mxu0 0.0
    %677 = vmatpush1.msra.mxu0 0.0
    %678 = vmatprep.subr.mxu0 0.0
    %679 = vmatpush1.msra.mxu0 0.0
    %680 = vmatprep.subr.mxu0 0.0
    %681 = vmatpush1.msra.mxu0 0.0
    %682 = vmatprep.subr.mxu0 0.0
    %683 = vmatpush1.msra.mxu0 0.0
    %684 = vmatprep.subr.mxu0 0.0
    %685 = vmatpush1.msra.mxu0 0.0
    %686 = vmatprep.subr.mxu0 0.0
    %687 = vmatpush1.msra.mxu0 0.0
    %688 = vmatprep.subr.mxu0 0.0
    %689 = vmatpush1.msra.mxu0 0.0
    %690 = vmatprep.mubr.f32.mxu0 0.0
    %691 = vmatmul.mubr.f32.gmra.mrb[0].mxu0 %v550
    %v692 = vpop.f32.mrb[0].mxu0
    %v693 = vadd.f32 %v623, %v692
    %v694 = vpop.f32.mrb[0].mxu0
    %695 = vdwg.mxu0
    %v696 = vmax.f32 %v693, 0.0
    %697 = vst [vmem:[#allocation4] sm:$0x1] %v696
    %v700 = vunpack.c.l.s4 1983009808
    %v701 = vunpack.c.0.s8 %v700
    %v702 = vlaneseq
    %v703 = vshrl.u32 %v702, 7
    %v704 = vsub.s32 %v701, %v703
    %v705 = vrot.slane %v696, %v704
    %v706 = vrot.slane %v705, 7
    %v707 = vrot.slane %v706, 2
    %709 = vst [vmem:[#allocation4 + $0x2] sm:$0x1] %v707
    %v710 = vcombine.high %v705, %v705
    %712 = vst [vmem:[#allocation4 + $0x4] sm:$0x1] %v710
    %v713 = vrot.slane %v710, 7
    %v714 = vrot.slane %v713, 2
    %716 = vst [vmem:[#allocation4 + $0x6] sm:$0x1] %v714
    %s717 = scalar_lea.vmem %s0, 1
    %v718 = vld [vmem:[%s717] ss:$2 sm:$0x3]
    %719 = vst.msk [vmem:[#allocation2] ss:$8 sm:$0x3] %vm30, %v718
    %720 = vst.msk [vmem:[#allocation2] ss:$8 sm:$0x0] %vm30, %v718
    %722 = vrot.lane.b32.xlu0 %v718, 127
    %v723 = vpop.permute.xlu0 %722
    %v724 = vrot.slane %v723, 1
    %v725 = vsel %vm46, %v723, %v724
    %727 = vst.msk [vmem:[%s49] ss:$8 sm:$0x3] %vm30, %v725
    %728 = vst.msk [vmem:[%s49] ss:$8 sm:$0x0] %vm30, %v725
    %729 = vrot.lane.b32.xlu0 %v718, 126
    %v730 = vpop.permute.xlu0 %729
    %v731 = vrot.slane %v730, 1
    %v732 = vsel %vm55, %v730, %v731
    %734 = vst.msk [vmem:[%s58] ss:$8 sm:$0x3] %vm30, %v732
    %735 = vst.msk [vmem:[%s58] ss:$8 sm:$0x0] %vm30, %v732
    %736 = vrot.lane.b32.xlu0 %v718, 125
    %v737 = vpop.permute.xlu0 %736
    %v738 = vrot.slane %v737, 1
    %v739 = vsel %vm64, %v737, %v738
    %741 = vst.msk [vmem:[%s67] ss:$8 sm:$0x3] %vm30, %v739
    %742 = vst.msk [vmem:[%s67] ss:$8 sm:$0x0] %vm30, %v739
    %743 = vrot.lane.b32.xlu0 %v718, 124
    %v744 = vpop.permute.xlu0 %743
    %v745 = vrot.slane %v744, 1
    %v746 = vsel %vm73, %v744, %v745
    %748 = vst.msk [vmem:[%s76] ss:$8 sm:$0x3] %vm30, %v746
    %749 = vst.msk [vmem:[%s76] ss:$8 sm:$0x0] %vm30, %v746
    %750 = vrot.lane.b32.xlu0 %v718, 123
    %v751 = vpop.permute.xlu0 %750
    %v752 = vrot.slane %v751, 1
    %v753 = vsel %vm82, %v751, %v752
    %755 = vst.msk [vmem:[%s85] ss:$8 sm:$0x3] %vm30, %v753
    %756 = vst.msk [vmem:[%s85] ss:$8 sm:$0x0] %vm30, %v753
    %757 = vrot.lane.b32.xlu0 %v718, 122
    %v758 = vpop.permute.xlu0 %757
    %v759 = vrot.slane %v758, 1
    %v760 = vsel %vm91, %v758, %v759
    %762 = vst.msk [vmem:[%s94] ss:$8 sm:$0x3] %vm30, %v760
    %763 = vst.msk [vmem:[%s94] ss:$8 sm:$0x0] %vm30, %v760
    %764 = vrot.lane.b32.xlu0 %v718, 121
    %v765 = vpop.permute.xlu0 %764
    %v766 = vrot.slane %v765, 1
    %v767 = vsel %vm100, %v765, %v766
    %769 = vst.msk [vmem:[%s103] ss:$8 sm:$0x3] %vm30, %v767
    %770 = vst.msk [vmem:[%s103] ss:$8 sm:$0x0] %vm30, %v767
    %771 = vrot.lane.b32.xlu0 %v718, 120
    %v772 = vpop.permute.xlu0 %771
    %v773 = vrot.slane %v772, 1
    %v774 = vsel %vm109, %v772, %v773
    %776 = vst.msk [vmem:[%s112] ss:$8 sm:$0x3] %vm30, %v774
    %777 = vst.msk [vmem:[%s112] ss:$8 sm:$0x0] %vm30, %v774
    %778 = vrot.lane.b32.xlu0 %v718, 119
    %v779 = vpop.permute.xlu0 %778
    %v780 = vrot.slane %v779, 1
    %v781 = vsel %vm118, %v779, %v780
    %783 = vst.msk [vmem:[%s121] ss:$8 sm:$0x3] %vm30, %v781
    %784 = vst.msk [vmem:[%s121] ss:$8 sm:$0x0] %vm30, %v781
    %785 = vrot.lane.b32.xlu0 %v718, 118
    %v786 = vpop.permute.xlu0 %785
    %v787 = vrot.slane %v786, 1
    %v788 = vsel %vm127, %v786, %v787
    %790 = vst.msk [vmem:[%s130] ss:$8 sm:$0x3] %vm30, %v788
    %791 = vst.msk [vmem:[%s130] ss:$8 sm:$0x0] %vm30, %v788
    %792 = vrot.lane.b32.xlu0 %v718, 117
    %v793 = vpop.permute.xlu0 %792
    %v794 = vrot.slane %v793, 1
    %v795 = vsel %vm136, %v793, %v794
    %797 = vst.msk [vmem:[%s139] ss:$8 sm:$0x3] %vm30, %v795
    %798 = vst.msk [vmem:[%s139] ss:$8 sm:$0x0] %vm30, %v795
    %799 = vrot.lane.b32.xlu0 %v718, 116
    %v800 = vpop.permute.xlu0 %799
    %v801 = vrot.slane %v800, 1
    %v802 = vsel %vm145, %v800, %v801
    %804 = vst.msk [vmem:[%s148] ss:$8 sm:$0x3] %vm30, %v802
    %805 = vst.msk [vmem:[%s148] ss:$8 sm:$0x0] %vm30, %v802
    %806 = vrot.lane.b32.xlu0 %v718, 115
    %v807 = vpop.permute.xlu0 %806
    %v808 = vrot.slane %v807, 1
    %v809 = vsel %vm154, %v807, %v808
    %811 = vst.msk [vmem:[%s157] ss:$8 sm:$0x3] %vm30, %v809
    %812 = vst.msk [vmem:[%s157] ss:$8 sm:$0x0] %vm30, %v809
    %813 = vrot.lane.b32.xlu0 %v718, 114
    %v814 = vpop.permute.xlu0 %813
    %v815 = vrot.slane %v814, 1
    %v816 = vsel %vm163, %v814, %v815
    %818 = vst.msk [vmem:[%s166] ss:$8 sm:$0x3] %vm30, %v816
    %819 = vst.msk [vmem:[%s166] ss:$8 sm:$0x0] %vm30, %v816
    %v820 = vld [vmem:[#allocation2] sm:$0xff]
    %v821 = vld [vmem:[#allocation2 + $0x8] sm:$0xff]
    %v822 = vld [vmem:[#allocation2 + $0x10] sm:$0xff]
    %v823 = vld [vmem:[#allocation2 + $0x18] sm:$0xff]
    %824 = vmatprep.subr.mxu0 %v821
    %825 = vmatpush1.msra.mxu0 %v820
    %826 = vmatprep.subr.mxu0 %v823
    %827 = vmatpush1.msra.mxu0 %v822
    %828 = vmatprep.subr.mxu0 0.0
    %829 = vmatpush1.msra.mxu0 0.0
    %830 = vmatprep.subr.mxu0 0.0
    %831 = vmatpush1.msra.mxu0 0.0
    %832 = vmatprep.subr.mxu0 0.0
    %833 = vmatpush1.msra.mxu0 0.0
    %834 = vmatprep.subr.mxu0 0.0
    %835 = vmatpush1.msra.mxu0 0.0
    %836 = vmatprep.subr.mxu0 0.0
    %837 = vmatpush1.msra.mxu0 0.0
    %838 = vmatprep.subr.mxu0 0.0
    %839 = vmatpush1.msra.mxu0 0.0
    %840 = vmatprep.subr.mxu0 0.0
    %841 = vmatpush1.msra.mxu0 0.0
    %842 = vmatprep.subr.mxu0 0.0
    %843 = vmatpush1.msra.mxu0 0.0
    %844 = vmatprep.subr.mxu0 0.0
    %845 = vmatpush1.msra.mxu0 0.0
    %846 = vmatprep.subr.mxu0 0.0
    %847 = vmatpush1.msra.mxu0 0.0
    %848 = vmatprep.subr.mxu0 0.0
    %849 = vmatpush1.msra.mxu0 0.0
    %850 = vmatprep.subr.mxu0 0.0
    %851 = vmatpush1.msra.mxu0 0.0
    %852 = vmatprep.subr.mxu0 0.0
    %853 = vmatpush1.msra.mxu0 0.0
    %854 = vmatprep.subr.mxu0 0.0
    %855 = vmatpush1.msra.mxu0 0.0
    %856 = vmatprep.subr.mxu0 0.0
    %857 = vmatpush1.msra.mxu0 0.0
    %858 = vmatprep.subr.mxu0 0.0
    %859 = vmatpush1.msra.mxu0 0.0
    %860 = vmatprep.subr.mxu0 0.0
    %861 = vmatpush1.msra.mxu0 0.0
    %862 = vmatprep.subr.mxu0 0.0
    %863 = vmatpush1.msra.mxu0 0.0
    %864 = vmatprep.subr.mxu0 0.0
    %865 = vmatpush1.msra.mxu0 0.0
    %866 = vmatprep.subr.mxu0 0.0
    %867 = vmatpush1.msra.mxu0 0.0
    %868 = vmatprep.subr.mxu0 0.0
    %869 = vmatpush1.msra.mxu0 0.0
    %870 = vmatprep.subr.mxu0 0.0
    %871 = vmatpush1.msra.mxu0 0.0
    %872 = vmatprep.subr.mxu0 0.0
    %873 = vmatpush1.msra.mxu0 0.0
    %874 = vmatprep.subr.mxu0 0.0
    %875 = vmatpush1.msra.mxu0 0.0
    %876 = vmatprep.subr.mxu0 0.0
    %877 = vmatpush1.msra.mxu0 0.0
    %878 = vmatprep.subr.mxu0 0.0
    %879 = vmatpush1.msra.mxu0 0.0
    %880 = vmatprep.subr.mxu0 0.0
    %881 = vmatpush1.msra.mxu0 0.0
    %882 = vmatprep.subr.mxu0 0.0
    %883 = vmatpush1.msra.mxu0 0.0
    %884 = vmatprep.subr.mxu0 0.0
    %885 = vmatpush1.msra.mxu0 0.0
    %886 = vmatprep.subr.mxu0 0.0
    %887 = vmatpush1.msra.mxu0 0.0
    %888 = vmatprep.mubr.f32.mxu0 0.0
    %889 = vmatmul.mubr.f32.gmra.mrb[0].mxu0 %v175
    %v890 = vpop.f32.mrb[0].mxu0
    %v891 = vadd.f32 0.0, %v890
    %v892 = vpop.f32.mrb[0].mxu0
    %v893 = vadd.f32 0.0, %v892
    %894 = vmatprep.mubr.f32.mxu0 0.0
    %895 = vmatmul.mubr.f32.gmra.mrb[0].mxu0 %v178
    %v896 = vpop.f32.mrb[0].mxu0
    %v897 = vadd.f32 0.0, %v896
    %v898 = vpop.f32.mrb[0].mxu0
    %v899 = vadd.f32 0.0, %v898
    %900 = vdwg.mxu0
    %v901 = vmax.f32 %v891, 0.0
    %v902 = vmax.f32 %v893, 0.0
    %v903 = vmax.f32 %v897, 0.0
    %v904 = vmax.f32 %v899, 0.0
    %905 = vst [vmem:[#allocation3] sm:$0xff] %v901
    %906 = vst [vmem:[#allocation3 + $0x8] sm:$0xff] %v903
    %911 = vrot.lane.b32.xlu0 %v901, 127
    %v912 = vpop.permute.xlu0 %911
    %913 = vrot.lane.b32.xlu0 %v902, 127
    %v914 = vpop.permute.xlu0 %913
    %915 = vrot.lane.b32.xlu0 %v903, 127
    %v916 = vpop.permute.xlu0 %915
    %917 = vrot.lane.b32.xlu0 %v904, 127
    %v918 = vpop.permute.xlu0 %917
    %v919 = vsel %vm46, %v912, %v914
    %v920 = vsel %vm46, %v916, %v918
    %923 = vst [vmem:[#allocation3 + $0x10] sm:$0xff] %v919
    %924 = vst [vmem:[#allocation3 + $0x18] sm:$0xff] %v920
    %925 = vrot.lane.b32.xlu0 %v901, 126
    %v926 = vpop.permute.xlu0 %925
    %927 = vrot.lane.b32.xlu0 %v902, 126
    %v928 = vpop.permute.xlu0 %927
    %929 = vrot.lane.b32.xlu0 %v903, 126
    %v930 = vpop.permute.xlu0 %929
    %931 = vrot.lane.b32.xlu0 %v904, 126
    %v932 = vpop.permute.xlu0 %931
    %v933 = vsel %vm55, %v926, %v928
    %v934 = vsel %vm55, %v930, %v932
    %937 = vst [vmem:[#allocation3 + $0x20] sm:$0xff] %v933
    %938 = vst [vmem:[#allocation3 + $0x28] sm:$0xff] %v934
    %939 = vrot.lane.b32.xlu0 %v901, 125
    %v940 = vpop.permute.xlu0 %939
    %941 = vrot.lane.b32.xlu0 %v902, 125
    %v942 = vpop.permute.xlu0 %941
    %943 = vrot.lane.b32.xlu0 %v903, 125
    %v944 = vpop.permute.xlu0 %943
    %945 = vrot.lane.b32.xlu0 %v904, 125
    %v946 = vpop.permute.xlu0 %945
    %v947 = vsel %vm64, %v940, %v942
    %v948 = vsel %vm64, %v944, %v946
    %951 = vst [vmem:[#allocation3 + $0x30] sm:$0xff] %v947
    %952 = vst [vmem:[#allocation3 + $0x38] sm:$0xff] %v948
    %953 = vrot.lane.b32.xlu0 %v901, 124
    %v954 = vpop.permute.xlu0 %953
    %955 = vrot.lane.b32.xlu0 %v902, 124
    %v956 = vpop.permute.xlu0 %955
    %957 = vrot.lane.b32.xlu0 %v903, 124
    %v958 = vpop.permute.xlu0 %957
    %959 = vrot.lane.b32.xlu0 %v904, 124
    %v960 = vpop.permute.xlu0 %959
    %v961 = vsel %vm73, %v954, %v956
    %v962 = vsel %vm73, %v958, %v960
    %965 = vst [vmem:[#allocation3 + $0x40] sm:$0xff] %v961
    %966 = vst [vmem:[#allocation3 + $0x48] sm:$0xff] %v962
    %967 = vrot.lane.b32.xlu0 %v901, 123
    %v968 = vpop.permute.xlu0 %967
    %969 = vrot.lane.b32.xlu0 %v902, 123
    %v970 = vpop.permute.xlu0 %969
    %971 = vrot.lane.b32.xlu0 %v903, 123
    %v972 = vpop.permute.xlu0 %971
    %973 = vrot.lane.b32.xlu0 %v904, 123
    %v974 = vpop.permute.xlu0 %973
    %v975 = vsel %vm82, %v968, %v970
    %v976 = vsel %vm82, %v972, %v974
    %979 = vst [vmem:[#allocation3 + $0x50] sm:$0xff] %v975
    %980 = vst [vmem:[#allocation3 + $0x58] sm:$0xff] %v976
    %981 = vrot.lane.b32.xlu0 %v901, 122
    %v982 = vpop.permute.xlu0 %981
    %983 = vrot.lane.b32.xlu0 %v902, 122
    %v984 = vpop.permute.xlu0 %983
    %985 = vrot.lane.b32.xlu0 %v903, 122
    %v986 = vpop.permute.xlu0 %985
    %987 = vrot.lane.b32.xlu0 %v904, 122
    %v988 = vpop.permute.xlu0 %987
    %v989 = vsel %vm91, %v982, %v984
    %v990 = vsel %vm91, %v986, %v988
    %993 = vst [vmem:[#allocation3 + $0x60] sm:$0xff] %v989
    %994 = vst [vmem:[#allocation3 + $0x68] sm:$0xff] %v990
    %995 = vrot.lane.b32.xlu0 %v901, 121
    %v996 = vpop.permute.xlu0 %995
    %997 = vrot.lane.b32.xlu0 %v902, 121
    %v998 = vpop.permute.xlu0 %997
    %999 = vrot.lane.b32.xlu0 %v903, 121
    %v1000 = vpop.permute.xlu0 %999
    %1001 = vrot.lane.b32.xlu0 %v904, 121
    %v1002 = vpop.permute.xlu0 %1001
    %v1003 = vsel %vm100, %v996, %v998
    %v1004 = vsel %vm100, %v1000, %v1002
    %1007 = vst [vmem:[#allocation3 + $0x70] sm:$0xff] %v1003
    %1008 = vst [vmem:[#allocation3 + $0x78] sm:$0xff] %v1004
    %1009 = vrot.lane.b32.xlu0 %v901, 120
    %v1010 = vpop.permute.xlu0 %1009
    %1011 = vrot.lane.b32.xlu0 %v902, 120
    %v1012 = vpop.permute.xlu0 %1011
    %1013 = vrot.lane.b32.xlu0 %v903, 120
    %v1014 = vpop.permute.xlu0 %1013
    %1015 = vrot.lane.b32.xlu0 %v904, 120
    %v1016 = vpop.permute.xlu0 %1015
    %v1017 = vsel %vm109, %v1010, %v1012
    %v1018 = vsel %vm109, %v1014, %v1016
    %1021 = vst [vmem:[#allocation3 + $0x80] sm:$0xff] %v1017
    %1022 = vst [vmem:[#allocation3 + $0x88] sm:$0xff] %v1018
    %1023 = vrot.lane.b32.xlu0 %v901, 119
    %v1024 = vpop.permute.xlu0 %1023
    %1025 = vrot.lane.b32.xlu0 %v902, 119
    %v1026 = vpop.permute.xlu0 %1025
    %1027 = vrot.lane.b32.xlu0 %v903, 119
    %v1028 = vpop.permute.xlu0 %1027
    %1029 = vrot.lane.b32.xlu0 %v904, 119
    %v1030 = vpop.permute.xlu0 %1029
    %v1031 = vsel %vm118, %v1024, %v1026
    %v1032 = vsel %vm118, %v1028, %v1030
    %1035 = vst [vmem:[#allocation3 + $0x90] sm:$0xff] %v1031
    %1036 = vst [vmem:[#allocation3 + $0x98] sm:$0xff] %v1032
    %1037 = vrot.lane.b32.xlu0 %v901, 118
    %v1038 = vpop.permute.xlu0 %1037
    %1039 = vrot.lane.b32.xlu0 %v902, 118
    %v1040 = vpop.permute.xlu0 %1039
    %1041 = vrot.lane.b32.xlu0 %v903, 118
    %v1042 = vpop.permute.xlu0 %1041
    %1043 = vrot.lane.b32.xlu0 %v904, 118
    %v1044 = vpop.permute.xlu0 %1043
    %v1045 = vsel %vm127, %v1038, %v1040
    %v1046 = vsel %vm127, %v1042, %v1044
    %1049 = vst [vmem:[#allocation3 + $0xa0] sm:$0xff] %v1045
    %1050 = vst [vmem:[#allocation3 + $0xa8] sm:$0xff] %v1046
    %1051 = vrot.lane.b32.xlu0 %v901, 117
    %v1052 = vpop.permute.xlu0 %1051
    %1053 = vrot.lane.b32.xlu0 %v902, 117
    %v1054 = vpop.permute.xlu0 %1053
    %1055 = vrot.lane.b32.xlu0 %v903, 117
    %v1056 = vpop.permute.xlu0 %1055
    %1057 = vrot.lane.b32.xlu0 %v904, 117
    %v1058 = vpop.permute.xlu0 %1057
    %v1059 = vsel %vm136, %v1052, %v1054
    %v1060 = vsel %vm136, %v1056, %v1058
    %1063 = vst [vmem:[#allocation3 + $0xb0] sm:$0xff] %v1059
    %1064 = vst [vmem:[#allocation3 + $0xb8] sm:$0xff] %v1060
    %1065 = vrot.lane.b32.xlu0 %v901, 116
    %v1066 = vpop.permute.xlu0 %1065
    %1067 = vrot.lane.b32.xlu0 %v902, 116
    %v1068 = vpop.permute.xlu0 %1067
    %1069 = vrot.lane.b32.xlu0 %v903, 116
    %v1070 = vpop.permute.xlu0 %1069
    %1071 = vrot.lane.b32.xlu0 %v904, 116
    %v1072 = vpop.permute.xlu0 %1071
    %v1073 = vsel %vm145, %v1066, %v1068
    %v1074 = vsel %vm145, %v1070, %v1072
    %1077 = vst [vmem:[#allocation3 + $0xc0] sm:$0xff] %v1073
    %1078 = vst [vmem:[#allocation3 + $0xc8] sm:$0xff] %v1074
    %1079 = vrot.lane.b32.xlu0 %v901, 115
    %v1080 = vpop.permute.xlu0 %1079
    %1081 = vrot.lane.b32.xlu0 %v902, 115
    %v1082 = vpop.permute.xlu0 %1081
    %1083 = vrot.lane.b32.xlu0 %v903, 115
    %v1084 = vpop.permute.xlu0 %1083
    %1085 = vrot.lane.b32.xlu0 %v904, 115
    %v1086 = vpop.permute.xlu0 %1085
    %v1087 = vsel %vm154, %v1080, %v1082
    %v1088 = vsel %vm154, %v1084, %v1086
    %1091 = vst [vmem:[#allocation3 + $0xd0] sm:$0xff] %v1087
    %1092 = vst [vmem:[#allocation3 + $0xd8] sm:$0xff] %v1088
    %1093 = vrot.lane.b32.xlu0 %v901, 114
    %v1094 = vpop.permute.xlu0 %1093
    %1095 = vrot.lane.b32.xlu0 %v902, 114
    %v1096 = vpop.permute.xlu0 %1095
    %1097 = vrot.lane.b32.xlu0 %v903, 114
    %v1098 = vpop.permute.xlu0 %1097
    %1099 = vrot.lane.b32.xlu0 %v904, 114
    %v1100 = vpop.permute.xlu0 %1099
    %v1101 = vsel %vm163, %v1094, %v1096
    %v1102 = vsel %vm163, %v1098, %v1100
    %1105 = vst [vmem:[#allocation3 + $0xe0] sm:$0xff] %v1101
    %1106 = vst [vmem:[#allocation3 + $0xe8] sm:$0xff] %v1102
    %1107 = vrot.lane.b32.xlu0 %v901, 113
    %v1108 = vpop.permute.xlu0 %1107
    %1109 = vrot.lane.b32.xlu0 %v902, 113
    %v1110 = vpop.permute.xlu0 %1109
    %1111 = vrot.lane.b32.xlu0 %v903, 113
    %v1112 = vpop.permute.xlu0 %1111
    %1113 = vrot.lane.b32.xlu0 %v904, 113
    %v1114 = vpop.permute.xlu0 %1113
    %v1115 = vsel %vm471, %v1108, %v1110
    %v1116 = vsel %vm471, %v1112, %v1114
    %1119 = vst [vmem:[#allocation3 + $0xf0] sm:$0xff] %v1115
    %1120 = vst [vmem:[#allocation3 + $0xf8] sm:$0xff] %v1116
    %1121 = vrot.lane.b32.xlu0 %v901, 112
    %v1122 = vpop.permute.xlu0 %1121
    %1123 = vrot.lane.b32.xlu0 %v902, 112
    %v1124 = vpop.permute.xlu0 %1123
    %1125 = vrot.lane.b32.xlu0 %v903, 112
    %v1126 = vpop.permute.xlu0 %1125
    %1127 = vrot.lane.b32.xlu0 %v904, 112
    %v1128 = vpop.permute.xlu0 %1127
    %v1129 = vsel %vm486, %v1122, %v1124
    %v1130 = vsel %vm486, %v1126, %v1128
    %1133 = vst [vmem:[#allocation3 + $0x100] sm:$0xff] %v1129
    %1134 = vst [vmem:[#allocation3 + $0x108] sm:$0xff] %v1130
    %1135 = vrot.lane.b32.xlu0 %v901, 111
    %v1136 = vpop.permute.xlu0 %1135
    %1137 = vrot.lane.b32.xlu0 %v902, 111
    %v1138 = vpop.permute.xlu0 %1137
    %1139 = vrot.lane.b32.xlu0 %v903, 111
    %v1140 = vpop.permute.xlu0 %1139
    %1141 = vrot.lane.b32.xlu0 %v904, 111
    %v1142 = vpop.permute.xlu0 %1141
    %v1143 = vsel %vm501, %v1136, %v1138
    %v1144 = vsel %vm501, %v1140, %v1142
    %1147 = vst [vmem:[#allocation3 + $0x110] sm:$0xff] %v1143
    %1148 = vst [vmem:[#allocation3 + $0x118] sm:$0xff] %v1144
    %v1149 = vld [vmem:[#allocation3] sm:$0xff]
    %v1150 = vld [vmem:[#allocation3 + $0x8] sm:$0xff]
    %v1151 = vld [vmem:[#allocation3 + $0x10] sm:$0xff]
    %v1152 = vld [vmem:[#allocation3 + $0x18] sm:$0xff]
    %v1153 = vld [vmem:[#allocation3 + $0x20] sm:$0xff]
    %v1154 = vld [vmem:[#allocation3 + $0x28] sm:$0xff]
    %v1155 = vld [vmem:[#allocation3 + $0x30] sm:$0xff]
    %v1156 = vld [vmem:[#allocation3 + $0x38] sm:$0xff]
    %v1157 = vld [vmem:[#allocation3 + $0x40] sm:$0xff]
    %v1158 = vld [vmem:[#allocation3 + $0x48] sm:$0xff]
    %v1159 = vld [vmem:[#allocation3 + $0x50] sm:$0xff]
    %v1160 = vld [vmem:[#allocation3 + $0x58] sm:$0xff]
    %v1161 = vld [vmem:[#allocation3 + $0x60] sm:$0xff]
    %v1162 = vld [vmem:[#allocation3 + $0x68] sm:$0xff]
    %v1163 = vld [vmem:[#allocation3 + $0x70] sm:$0xff]
    %v1164 = vld [vmem:[#allocation3 + $0x78] sm:$0xff]
    %v1165 = vld [vmem:[#allocation3 + $0x80] sm:$0xff]
    %v1166 = vld [vmem:[#allocation3 + $0x88] sm:$0xff]
    %v1167 = vld [vmem:[#allocation3 + $0x90] sm:$0xff]
    %v1168 = vld [vmem:[#allocation3 + $0x98] sm:$0xff]
    %v1169 = vld [vmem:[#allocation3 + $0xa0] sm:$0xff]
    %v1170 = vld [vmem:[#allocation3 + $0xa8] sm:$0xff]
    %v1171 = vld [vmem:[#allocation3 + $0xb0] sm:$0xff]
    %v1172 = vld [vmem:[#allocation3 + $0xb8] sm:$0xff]
    %v1173 = vld [vmem:[#allocation3 + $0xc0] sm:$0xff]
    %v1174 = vld [vmem:[#allocation3 + $0xc8] sm:$0xff]
    %v1175 = vld [vmem:[#allocation3 + $0xd0] sm:$0xff]
    %v1176 = vld [vmem:[#allocation3 + $0xd8] sm:$0xff]
    %v1177 = vld [vmem:[#allocation3 + $0xe0] sm:$0xff]
    %v1178 = vld [vmem:[#allocation3 + $0xe8] sm:$0xff]
    %v1179 = vld [vmem:[#allocation3 + $0xf0] sm:$0xff]
    %v1180 = vld [vmem:[#allocation3 + $0xf8] sm:$0xff]
    %v1181 = vld [vmem:[#allocation3 + $0x100] sm:$0xff]
    %v1182 = vld [vmem:[#allocation3 + $0x108] sm:$0xff]
    %v1183 = vld [vmem:[#allocation3 + $0x110] sm:$0xff]
    %v1184 = vld [vmem:[#allocation3 + $0x118] sm:$0xff]
    %v1185 = vld [vmem:[#allocation3 + $0x120] sm:$0x1]
    %v1187 = vsel %vm552, %v1185, 0
    %1189 = vmatprep.subr.mxu0 0.0
    %1190 = vmatpush1.msra.mxu0 %v1149
    %1191 = vmatprep.subr.mxu0 0.0
    %1192 = vmatpush1.msra.mxu0 %v1150
    %1193 = vmatprep.subr.mxu0 0.0
    %1194 = vmatpush1.msra.mxu0 %v1151
    %1195 = vmatprep.subr.mxu0 0.0
    %1196 = vmatpush1.msra.mxu0 %v1152
    %1197 = vmatprep.subr.mxu0 0.0
    %1198 = vmatpush1.msra.mxu0 %v1153
    %1199 = vmatprep.subr.mxu0 0.0
    %1200 = vmatpush1.msra.mxu0 %v1154
    %1201 = vmatprep.subr.mxu0 0.0
    %1202 = vmatpush1.msra.mxu0 %v1155
    %1203 = vmatprep.subr.mxu0 0.0
    %1204 = vmatpush1.msra.mxu0 %v1156
    %1205 = vmatprep.subr.mxu0 0.0
    %1206 = vmatpush1.msra.mxu0 %v1157
    %1207 = vmatprep.subr.mxu0 0.0
    %1208 = vmatpush1.msra.mxu0 %v1158
    %1209 = vmatprep.subr.mxu0 0.0
    %1210 = vmatpush1.msra.mxu0 %v1159
    %1211 = vmatprep.subr.mxu0 0.0
    %1212 = vmatpush1.msra.mxu0 %v1160
    %1213 = vmatprep.subr.mxu0 0.0
    %1214 = vmatpush1.msra.mxu0 %v1161
    %1215 = vmatprep.subr.mxu0 0.0
    %1216 = vmatpush1.msra.mxu0 %v1162
    %1217 = vmatprep.subr.mxu0 0.0
    %1218 = vmatpush1.msra.mxu0 %v1163
    %1219 = vmatprep.subr.mxu0 0.0
    %1220 = vmatpush1.msra.mxu0 %v1164
    %1221 = vmatprep.subr.mxu0 0.0
    %1222 = vmatpush1.msra.mxu0 %v1165
    %1223 = vmatprep.subr.mxu0 0.0
    %1224 = vmatpush1.msra.mxu0 %v1166
    %1225 = vmatprep.subr.mxu0 0.0
    %1226 = vmatpush1.msra.mxu0 %v1167
    %1227 = vmatprep.subr.mxu0 0.0
    %1228 = vmatpush1.msra.mxu0 %v1168
    %1229 = vmatprep.subr.mxu0 0.0
    %1230 = vmatpush1.msra.mxu0 %v1169
    %1231 = vmatprep.subr.mxu0 0.0
    %1232 = vmatpush1.msra.mxu0 %v1170
    %1233 = vmatprep.subr.mxu0 0.0
    %1234 = vmatpush1.msra.mxu0 %v1171
    %1235 = vmatprep.subr.mxu0 0.0
    %1236 = vmatpush1.msra.mxu0 %v1172
    %1237 = vmatprep.subr.mxu0 0.0
    %1238 = vmatpush1.msra.mxu0 %v1173
    %1239 = vmatprep.subr.mxu0 0.0
    %1240 = vmatpush1.msra.mxu0 %v1174
    %1241 = vmatprep.subr.mxu0 0.0
    %1242 = vmatpush1.msra.mxu0 %v1175
    %1243 = vmatprep.subr.mxu0 0.0
    %1244 = vmatpush1.msra.mxu0 %v1176
    %1245 = vmatprep.subr.mxu0 0.0
    %1246 = vmatpush1.msra.mxu0 %v1177
    %1247 = vmatprep.subr.mxu0 0.0
    %1248 = vmatpush1.msra.mxu0 %v1178
    %1249 = vmatprep.subr.mxu0 0.0
    %1250 = vmatpush1.msra.mxu0 %v1179
    %1251 = vmatprep.subr.mxu0 0.0
    %1252 = vmatpush1.msra.mxu0 %v1180
    %1253 = vmatprep.mubr.f32.mxu0 %v547
    %1254 = vmatmul.mubr.f32.gmra.mrb[0].mxu0 %v37
    %v1255 = vpop.f32.mrb[0].mxu0
    %v1256 = vadd.f32 0.0, %v1255
    %v1257 = vpop.f32.mrb[0].mxu0
    %1258 = vdwg.mxu0
    %1259 = vmatprep.subr.mxu0 0.0
    %1260 = vmatpush1.msra.mxu0 %v1181
    %1261 = vmatprep.subr.mxu0 0.0
    %1262 = vmatpush1.msra.mxu0 %v1182
    %1263 = vmatprep.subr.mxu0 0.0
    %1264 = vmatpush1.msra.mxu0 %v1183
    %1265 = vmatprep.subr.mxu0 0.0
    %1266 = vmatpush1.msra.mxu0 %v1184
    %1267 = vmatprep.subr.mxu0 0.0
    %1268 = vmatpush1.msra.mxu0 %v1187
    %1269 = vmatprep.subr.mxu0 0.0
    %1270 = vmatpush1.msra.mxu0 0.0
    %1271 = vmatprep.subr.mxu0 0.0
    %1272 = vmatpush1.msra.mxu0 0.0
    %1273 = vmatprep.subr.mxu0 0.0
    %1274 = vmatpush1.msra.mxu0 0.0
    %1275 = vmatprep.subr.mxu0 0.0
    %1276 = vmatpush1.msra.mxu0 0.0
    %1277 = vmatprep.subr.mxu0 0.0
    %1278 = vmatpush1.msra.mxu0 0.0
    %1279 = vmatprep.subr.mxu0 0.0
    %1280 = vmatpush1.msra.mxu0 0.0
    %1281 = vmatprep.subr.mxu0 0.0
    %1282 = vmatpush1.msra.mxu0 0.0
    %1283 = vmatprep.subr.mxu0 0.0
    %1284 = vmatpush1.msra.mxu0 0.0
    %1285 = vmatprep.subr.mxu0 0.0
    %1286 = vmatpush1.msra.mxu0 0.0
    %1287 = vmatprep.subr.mxu0 0.0
    %1288 = vmatpush1.msra.mxu0 0.0
    %1289 = vmatprep.subr.mxu0 0.0
    %1290 = vmatpush1.msra.mxu0 0.0
    %1291 = vmatprep.subr.mxu0 0.0
    %1292 = vmatpush1.msra.mxu0 0.0
    %1293 = vmatprep.subr.mxu0 0.0
    %1294 = vmatpush1.msra.mxu0 0.0
    %1295 = vmatprep.subr.mxu0 0.0
    %1296 = vmatpush1.msra.mxu0 0.0
    %1297 = vmatprep.subr.mxu0 0.0
    %1298 = vmatpush1.msra.mxu0 0.0
    %1299 = vmatprep.subr.mxu0 0.0
    %1300 = vmatpush1.msra.mxu0 0.0
    %1301 = vmatprep.subr.mxu0 0.0
    %1302 = vmatpush1.msra.mxu0 0.0
    %1303 = vmatprep.subr.mxu0 0.0
    %1304 = vmatpush1.msra.mxu0 0.0
    %1305 = vmatprep.subr.mxu0 0.0
    %1306 = vmatpush1.msra.mxu0 0.0
    %1307 = vmatprep.subr.mxu0 0.0
    %1308 = vmatpush1.msra.mxu0 0.0
    %1309 = vmatprep.subr.mxu0 0.0
    %1310 = vmatpush1.msra.mxu0 0.0
    %1311 = vmatprep.subr.mxu0 0.0
    %1312 = vmatpush1.msra.mxu0 0.0
    %1313 = vmatprep.subr.mxu0 0.0
    %1314 = vmatpush1.msra.mxu0 0.0
    %1315 = vmatprep.subr.mxu0 0.0
    %1316 = vmatpush1.msra.mxu0 0.0
    %1317 = vmatprep.subr.mxu0 0.0
    %1318 = vmatpush1.msra.mxu0 0.0
    %1319 = vmatprep.subr.mxu0 0.0
    %1320 = vmatpush1.msra.mxu0 0.0
    %1321 = vmatprep.subr.mxu0 0.0
    %1322 = vmatpush1.msra.mxu0 0.0
    %1323 = vmatprep.mubr.f32.mxu0 0.0
    %1324 = vmatmul.mubr.f32.gmra.mrb[0].mxu0 %v550
    %v1325 = vpop.f32.mrb[0].mxu0
    %v1326 = vadd.f32 %v1256, %v1325
    %v1327 = vpop.f32.mrb[0].mxu0
    %1328 = vdwg.mxu0
    %v1329 = vmax.f32 %v1326, 0.0
    %1330 = vst [vmem:[#allocation4 + $0x1] sm:$0x1] %v1329
    %v1333 = vunpack.c.l.s4 1983009808
    %v1334 = vunpack.c.0.s8 %v1333
    %v1335 = vlaneseq
    %v1336 = vshrl.u32 %v1335, 7
    %v1337 = vsub.s32 %v1334, %v1336
    %v1338 = vrot.slane %v1329, %v1337
    %v1339 = vrot.slane %v1338, 7
    %v1340 = vrot.slane %v1339, 2
    %1342 = vst [vmem:[#allocation4 + $0x3] sm:$0x1] %v1340
    %v1343 = vcombine.high %v1338, %v1338
    %1345 = vst [vmem:[#allocation4 + $0x5] sm:$0x1] %v1343
    %v1346 = vrot.slane %v1343, 7
    %v1347 = vrot.slane %v1346, 2
    %1349 = vst [vmem:[#allocation4 + $0x7] sm:$0x1] %v1347
    %v1350 = vld [vmem:[#allocation4] sm:$0xff]
    %v1351 = vld [vmem:[%s3] sm:$0xff]
    %v1352 = vld [vmem:[%s3 + $0x8] sm:$0xff]
    %v1353 = vld [vmem:[%s3 + $0x10] sm:$0xff]
    %v1354 = vld [vmem:[%s3 + $0x18] sm:$0xff]
    %v1355 = vld [vmem:[%s3 + $0x20] sm:$0xff]
    %v1356 = vld [vmem:[%s3 + $0x28] sm:$0xff]
    %v1357 = vld [vmem:[%s3 + $0x30] sm:$0xff]
    %v1358 = vld [vmem:[%s3 + $0x38] sm:$0xff]
    %v1359 = vld [vmem:[%s3 + $0x40] sm:$0xff]
    %v1360 = vld [vmem:[%s3 + $0x48] sm:$0xff]
    %v1361 = vld [vmem:[%s3 + $0x50] sm:$0xff]
    %v1362 = vld [vmem:[%s3 + $0x58] sm:$0xff]
    %v1363 = vld [vmem:[%s3 + $0x60] sm:$0xff]
    %v1364 = vld [vmem:[%s3 + $0x68] sm:$0xff]
    %v1365 = vld [vmem:[%s3 + $0x70] sm:$0xff]
    %v1366 = vld [vmem:[%s3 + $0x78] sm:$0xff]
    %v1367 = vld [vmem:[%s3 + $0x80] sm:$0xff]
    %v1368 = vld [vmem:[%s3 + $0x88] sm:$0xff]
    %v1369 = vld [vmem:[%s3 + $0x90] sm:$0xff]
    %v1370 = vld [vmem:[%s3 + $0x98] sm:$0xff]
    %v1371 = vld [vmem:[%s3 + $0xa0] sm:$0xff]
    %v1372 = vld [vmem:[%s3 + $0xa8] sm:$0xff]
    %v1373 = vld [vmem:[%s3 + $0xb0] sm:$0xff]
    %v1374 = vld [vmem:[%s3 + $0xb8] sm:$0xff]
    %v1375 = vld [vmem:[%s3 + $0xc0] sm:$0xff]
    %v1376 = vld [vmem:[%s3 + $0xc8] sm:$0xff]
    %v1377 = vld [vmem:[%s3 + $0xd0] sm:$0xff]
    %v1378 = vld [vmem:[%s3 + $0xd8] sm:$0xff]
    %v1379 = vld [vmem:[%s3 + $0xe0] sm:$0xff]
    %v1380 = vld [vmem:[%s3 + $0xe8] sm:$0xff]
    %v1381 = vld [vmem:[%s3 + $0xf0] sm:$0xff]
    %v1382 = vld [vmem:[%s3 + $0xf8] sm:$0xff]
    %v1383 = vld [vmem:[%s3 + $0x100] sm:$0xff]
    %v1384 = vld [vmem:[%s3 + $0x108] sm:$0xff]
    %v1385 = vld [vmem:[%s3 + $0x110] sm:$0xff]
    %v1386 = vld [vmem:[%s3 + $0x118] sm:$0xff]
    %v1387 = vld [vmem:[%s3 + $0x120] sm:$0xff]
    %v1388 = vld [vmem:[%s3 + $0x128] sm:$0xff]
    %v1389 = vld [vmem:[%s3 + $0x130] sm:$0xff]
    %v1390 = vld [vmem:[%s3 + $0x138] sm:$0xff]
    %v1391 = vld [vmem:[%s3 + $0x140] sm:$0xff]
    %v1392 = vld [vmem:[%s3 + $0x148] sm:$0xff]
    %v1393 = vld [vmem:[%s3 + $0x150] sm:$0xff]
    %v1394 = vld [vmem:[%s3 + $0x158] sm:$0xff]
    %v1395 = vld [vmem:[%s3 + $0x160] sm:$0xff]
    %v1396 = vld [vmem:[%s3 + $0x168] sm:$0xff]
    %v1397 = vld [vmem:[%s3 + $0x170] sm:$0xff]
    %v1398 = vld [vmem:[%s3 + $0x178] sm:$0xff]
    %v1399 = vld [vmem:[%s3 + $0x180] sm:$0xff]
    %v1400 = vld [vmem:[%s3 + $0x188] sm:$0xff]
    %v1401 = vld [vmem:[%s3 + $0x190] sm:$0xff]
    %v1402 = vld [vmem:[%s3 + $0x198] sm:$0xff]
    %v1403 = vld [vmem:[%s3 + $0x1a0] sm:$0xff]
    %v1404 = vld [vmem:[%s3 + $0x1a8] sm:$0xff]
    %v1405 = vld [vmem:[%s3 + $0x1b0] sm:$0xff]
    %v1406 = vld [vmem:[%s3 + $0x1b8] sm:$0xff]
    %v1407 = vld [vmem:[%s3 + $0x1c0] sm:$0xff]
    %v1408 = vld [vmem:[%s3 + $0x1c8] sm:$0xff]
    %v1409 = vld [vmem:[%s3 + $0x1d0] sm:$0xff]
    %v1410 = vld [vmem:[%s3 + $0x1d8] sm:$0xff]
    %v1411 = vld [vmem:[%s3 + $0x1e0] sm:$0xff]
    %v1412 = vld [vmem:[%s3 + $0x1e8] sm:$0xff]
    %v1413 = vld [vmem:[%s3 + $0x1f0] sm:$0xff]
    %v1414 = vld [vmem:[%s3 + $0x1f8] sm:$0xff]
    %v1415 = vld [vmem:[%s4] sm:$0x1]
    %v1417 = vlaneseq
    %v1418 = vshrl.u32 %v1417, 7
    %v1419 = vsub.s32 0, %v1418
    %v1420 = vrot.slane %v1415, %v1419
    %v1423 = vcombine.high %v1350, %v1350
    %v1425 = vunpack.c.l.s4 1983009808
    %v1426 = vunpack.c.0.s8 %v1425
    %v1427 = vlaneseq
    %v1428 = vshrl.u32 %v1427, 7
    %v1429 = vsub.s32 %v1426, %v1428
    %v1430 = vrot.slane %v1350, %v1429
    %v1432 = vunpack.c.l.s4 1983009808
    %v1433 = vunpack.c.0.s8 %v1432
    %v1434 = vlaneseq
    %v1435 = vshrl.u32 %v1434, 7
    %v1436 = vsub.s32 %v1433, %v1435
    %v1437 = vrot.slane %v1423, %v1436
    %v1438 = vcombine.high %v1430, %v1430
    %v1439 = vcombine.high %v1437, %v1437
    %1444 = vmatprep.subr.mxu0 0.0
    %1445 = vmatpush1.msra.mxu0 %v1351
    %1446 = vmatprep.subr.mxu0 0.0
    %1447 = vmatpush1.msra.mxu0 %v1352
    %1448 = vmatprep.subr.mxu0 0.0
    %1449 = vmatpush1.msra.mxu0 %v1353
    %1450 = vmatprep.subr.mxu0 0.0
    %1451 = vmatpush1.msra.mxu0 %v1354
    %1452 = vmatprep.subr.mxu0 0.0
    %1453 = vmatpush1.msra.mxu0 %v1355
    %1454 = vmatprep.subr.mxu0 0.0
    %1455 = vmatpush1.msra.mxu0 %v1356
    %1456 = vmatprep.subr.mxu0 0.0
    %1457 = vmatpush1.msra.mxu0 %v1357
    %1458 = vmatprep.subr.mxu0 0.0
    %1459 = vmatpush1.msra.mxu0 %v1358
    %1460 = vmatprep.subr.mxu0 0.0
    %1461 = vmatpush1.msra.mxu0 %v1359
    %1462 = vmatprep.subr.mxu0 0.0
    %1463 = vmatpush1.msra.mxu0 %v1360
    %1464 = vmatprep.subr.mxu0 0.0
    %1465 = vmatpush1.msra.mxu0 %v1361
    %1466 = vmatprep.subr.mxu0 0.0
    %1467 = vmatpush1.msra.mxu0 %v1362
    %1468 = vmatprep.subr.mxu0 0.0
    %1469 = vmatpush1.msra.mxu0 %v1363
    %1470 = vmatprep.subr.mxu0 0.0
    %1471 = vmatpush1.msra.mxu0 %v1364
    %1472 = vmatprep.subr.mxu0 0.0
    %1473 = vmatpush1.msra.mxu0 %v1365
    %1474 = vmatprep.subr.mxu0 0.0
    %1475 = vmatpush1.msra.mxu0 %v1366
    %1476 = vmatprep.subr.mxu0 0.0
    %1477 = vmatpush1.msra.mxu0 %v1367
    %1478 = vmatprep.subr.mxu0 0.0
    %1479 = vmatpush1.msra.mxu0 %v1368
    %1480 = vmatprep.subr.mxu0 0.0
    %1481 = vmatpush1.msra.mxu0 %v1369
    %1482 = vmatprep.subr.mxu0 0.0
    %1483 = vmatpush1.msra.mxu0 %v1370
    %1484 = vmatprep.subr.mxu0 0.0
    %1485 = vmatpush1.msra.mxu0 %v1371
    %1486 = vmatprep.subr.mxu0 0.0
    %1487 = vmatpush1.msra.mxu0 %v1372
    %1488 = vmatprep.subr.mxu0 0.0
    %1489 = vmatpush1.msra.mxu0 %v1373
    %1490 = vmatprep.subr.mxu0 0.0
    %1491 = vmatpush1.msra.mxu0 %v1374
    %1492 = vmatprep.subr.mxu0 0.0
    %1493 = vmatpush1.msra.mxu0 %v1375
    %1494 = vmatprep.subr.mxu0 0.0
    %1495 = vmatpush1.msra.mxu0 %v1376
    %1496 = vmatprep.subr.mxu0 0.0
    %1497 = vmatpush1.msra.mxu0 %v1377
    %1498 = vmatprep.subr.mxu0 0.0
    %1499 = vmatpush1.msra.mxu0 %v1378
    %1500 = vmatprep.subr.mxu0 0.0
    %1501 = vmatpush1.msra.mxu0 %v1379
    %1502 = vmatprep.subr.mxu0 0.0
    %1503 = vmatpush1.msra.mxu0 %v1380
    %1504 = vmatprep.subr.mxu0 0.0
    %1505 = vmatpush1.msra.mxu0 %v1381
    %1506 = vmatprep.subr.mxu0 0.0
    %1507 = vmatpush1.msra.mxu0 %v1382
    %1508 = vmatprep.mubr.f32.mxu0 %v1438
    %1509 = vmatmul.mubr.f32.gmra.mrb[0].mxu0 %v1430
    %v1510 = vpop.f32.mrb[0].mxu0
    %v1511 = vadd.f32 %v1420, %v1510
    %v1512 = vpop.f32.mrb[0].mxu0
    %1513 = vdwg.mxu0
    %1514 = vmatprep.subr.mxu0 0.0
    %1515 = vmatpush1.msra.mxu0 %v1383
    %1516 = vmatprep.subr.mxu0 0.0
    %1517 = vmatpush1.msra.mxu0 %v1384
    %1518 = vmatprep.subr.mxu0 0.0
    %1519 = vmatpush1.msra.mxu0 %v1385
    %1520 = vmatprep.subr.mxu0 0.0
    %1521 = vmatpush1.msra.mxu0 %v1386
    %1522 = vmatprep.subr.mxu0 0.0
    %1523 = vmatpush1.msra.mxu0 %v1387
    %1524 = vmatprep.subr.mxu0 0.0
    %1525 = vmatpush1.msra.mxu0 %v1388
    %1526 = vmatprep.subr.mxu0 0.0
    %1527 = vmatpush1.msra.mxu0 %v1389
    %1528 = vmatprep.subr.mxu0 0.0
    %1529 = vmatpush1.msra.mxu0 %v1390
    %1530 = vmatprep.subr.mxu0 0.0
    %1531 = vmatpush1.msra.mxu0 %v1391
    %1532 = vmatprep.subr.mxu0 0.0
    %1533 = vmatpush1.msra.mxu0 %v1392
    %1534 = vmatprep.subr.mxu0 0.0
    %1535 = vmatpush1.msra.mxu0 %v1393
    %1536 = vmatprep.subr.mxu0 0.0
    %1537 = vmatpush1.msra.mxu0 %v1394
    %1538 = vmatprep.subr.mxu0 0.0
    %1539 = vmatpush1.msra.mxu0 %v1395
    %1540 = vmatprep.subr.mxu0 0.0
    %1541 = vmatpush1.msra.mxu0 %v1396
    %1542 = vmatprep.subr.mxu0 0.0
    %1543 = vmatpush1.msra.mxu0 %v1397
    %1544 = vmatprep.subr.mxu0 0.0
    %1545 = vmatpush1.msra.mxu0 %v1398
    %1546 = vmatprep.subr.mxu0 0.0
    %1547 = vmatpush1.msra.mxu0 %v1399
    %1548 = vmatprep.subr.mxu0 0.0
    %1549 = vmatpush1.msra.mxu0 %v1400
    %1550 = vmatprep.subr.mxu0 0.0
    %1551 = vmatpush1.msra.mxu0 %v1401
    %1552 = vmatprep.subr.mxu0 0.0
    %1553 = vmatpush1.msra.mxu0 %v1402
    %1554 = vmatprep.subr.mxu0 0.0
    %1555 = vmatpush1.msra.mxu0 %v1403
    %1556 = vmatprep.subr.mxu0 0.0
    %1557 = vmatpush1.msra.mxu0 %v1404
    %1558 = vmatprep.subr.mxu0 0.0
    %1559 = vmatpush1.msra.mxu0 %v1405
    %1560 = vmatprep.subr.mxu0 0.0
    %1561 = vmatpush1.msra.mxu0 %v1406
    %1562 = vmatprep.subr.mxu0 0.0
    %1563 = vmatpush1.msra.mxu0 %v1407
    %1564 = vmatprep.subr.mxu0 0.0
    %1565 = vmatpush1.msra.mxu0 %v1408
    %1566 = vmatprep.subr.mxu0 0.0
    %1567 = vmatpush1.msra.mxu0 %v1409
    %1568 = vmatprep.subr.mxu0 0.0
    %1569 = vmatpush1.msra.mxu0 %v1410
    %1570 = vmatprep.subr.mxu0 0.0
    %1571 = vmatpush1.msra.mxu0 %v1411
    %1572 = vmatprep.subr.mxu0 0.0
    %1573 = vmatpush1.msra.mxu0 %v1412
    %1574 = vmatprep.subr.mxu0 0.0
    %1575 = vmatpush1.msra.mxu0 %v1413
    %1576 = vmatprep.subr.mxu0 0.0
    %1577 = vmatpush1.msra.mxu0 %v1414
    %1578 = vmatprep.mubr.f32.mxu0 %v1439
    %1579 = vmatmul.mubr.f32.gmra.mrb[0].mxu0 %v1437
    %v1580 = vpop.f32.mrb[0].mxu0
    %v1581 = vadd.f32 %v1511, %v1580
    %v1582 = vpop.f32.mrb[0].mxu0
    %1583 = vdwg.mxu0
    %v1584 = vmax.f32 %v1581, 0.0
    %v1585 = vld [vmem:[%s5] sm:$0xff]
    %v1586 = vld [vmem:[%s5 + $0x8] sm:$0xff]
    %v1587 = vld [vmem:[%s5 + $0x10] sm:$0xff]
    %v1588 = vld [vmem:[%s5 + $0x18] sm:$0xff]
    %v1589 = vld [vmem:[%s6] sm:$0x1]
    %v1591 = vlaneseq
    %v1592 = vshrl.u32 %v1591, 7
    %v1593 = vsub.s32 0, %v1592
    %v1594 = vrot.slane %v1589, %v1593
    %vm1596 = vcmask 261120
    %v1598 = vsel %vm1596, %v1584, 0
    %1600 = vmatprep.subr.mxu0 0.0
    %1601 = vmatpush1.msra.mxu0 %v1585
    %1602 = vmatprep.subr.mxu0 0.0
    %1603 = vmatpush1.msra.mxu0 %v1586
    %1604 = vmatprep.subr.mxu0 0.0
    %1605 = vmatpush1.msra.mxu0 %v1587
    %1606 = vmatprep.subr.mxu0 0.0
    %1607 = vmatpush1.msra.mxu0 %v1588
    %1608 = vmatprep.subr.mxu0 0.0
    %1609 = vmatpush1.msra.mxu0 0.0
    %1610 = vmatprep.subr.mxu0 0.0
    %1611 = vmatpush1.msra.mxu0 0.0
    %1612 = vmatprep.subr.mxu0 0.0
    %1613 = vmatpush1.msra.mxu0 0.0
    %1614 = vmatprep.subr.mxu0 0.0
    %1615 = vmatpush1.msra.mxu0 0.0
    %1616 = vmatprep.subr.mxu0 0.0
    %1617 = vmatpush1.msra.mxu0 0.0
    %1618 = vmatprep.subr.mxu0 0.0
    %1619 = vmatpush1.msra.mxu0 0.0
    %1620 = vmatprep.subr.mxu0 0.0
    %1621 = vmatpush1.msra.mxu0 0.0
    %1622 = vmatprep.subr.mxu0 0.0
    %1623 = vmatpush1.msra.mxu0 0.0
    %1624 = vmatprep.subr.mxu0 0.0
    %1625 = vmatpush1.msra.mxu0 0.0
    %1626 = vmatprep.subr.mxu0 0.0
    %1627 = vmatpush1.msra.mxu0 0.0
    %1628 = vmatprep.subr.mxu0 0.0
    %1629 = vmatpush1.msra.mxu0 0.0
    %1630 = vmatprep.subr.mxu0 0.0
    %1631 = vmatpush1.msra.mxu0 0.0
    %1632 = vmatprep.subr.mxu0 0.0
    %1633 = vmatpush1.msra.mxu0 0.0
    %1634 = vmatprep.subr.mxu0 0.0
    %1635 = vmatpush1.msra.mxu0 0.0
    %1636 = vmatprep.subr.mxu0 0.0
    %1637 = vmatpush1.msra.mxu0 0.0
    %1638 = vmatprep.subr.mxu0 0.0
    %1639 = vmatpush1.msra.mxu0 0.0
    %1640 = vmatprep.subr.mxu0 0.0
    %1641 = vmatpush1.msra.mxu0 0.0
    %1642 = vmatprep.subr.mxu0 0.0
    %1643 = vmatpush1.msra.mxu0 0.0
    %1644 = vmatprep.subr.mxu0 0.0
    %1645 = vmatpush1.msra.mxu0 0.0
    %1646 = vmatprep.subr.mxu0 0.0
    %1647 = vmatpush1.msra.mxu0 0.0
    %1648 = vmatprep.subr.mxu0 0.0
    %1649 = vmatpush1.msra.mxu0 0.0
    %1650 = vmatprep.subr.mxu0 0.0
    %1651 = vmatpush1.msra.mxu0 0.0
    %1652 = vmatprep.subr.mxu0 0.0
    %1653 = vmatpush1.msra.mxu0 0.0
    %1654 = vmatprep.subr.mxu0 0.0
    %1655 = vmatpush1.msra.mxu0 0.0
    %1656 = vmatprep.subr.mxu0 0.0
    %1657 = vmatpush1.msra.mxu0 0.0
    %1658 = vmatprep.subr.mxu0 0.0
    %1659 = vmatpush1.msra.mxu0 0.0
    %1660 = vmatprep.subr.mxu0 0.0
    %1661 = vmatpush1.msra.mxu0 0.0
    %1662 = vmatprep.subr.mxu0 0.0
    %1663 = vmatpush1.msra.mxu0 0.0
    %1664 = vmatprep.mubr.f32.mxu0 0.0
    %1665 = vmatmul.mubr.f32.gmra.mrb[0].mxu0 %v1598
    %v1666 = vpop.f32.mrb[0].mxu0
    %v1667 = vadd.f32 %v1594, %v1666
    %v1668 = vpop.f32.mrb[0].mxu0
    %1669 = vdwg.mxu0
    %vm1670 = vcmask 25600
    %v1671 = vsel %vm1670, %v1667, -inf
    %1672 = vmax.xlane.f32.xlu0 %v1671
    %v1673 = vpop.xlane.xlu0 %1672
    %v1674 = vsub.f32 %v1667, %v1673
    %v1675 = vmul.f32 %v1674, 1.442695
    %v1676 = vpow.pop %v1675
    %v1677 = vsel %vm1670, %v1676, 0.0
    %1678 = vadd.xlane.f32.xlu0 %v1677
    %v1679 = vpop.xlane.xlu0 %1678
    %v1680 = vrcp.pop %v1679
    %v1681 = vmul.f32 %v1676, %v1680
    %1682 = vst.msk [vmem:[#allocation5] sm:$0x3] %vm1670, %v1681
    // Predicated region
    $region30: #{tpu_custom_call.1} parent=1 // pred_check
      _
    $region31: #{tpu_custom_call.1} parent=1 // pred_check_branch
      %1684 = sbr.rel (0) target = $region33
    $region32: #{tpu_custom_call.1} parent=1 // pred_region
      %s1686 = ssub.s32 32, 32
      %1687 = vsyncadd [#allocation6], %s1686
      %s1689 = sshll.u32 [#allocation5], 4
      %s1690 = int_to_ptr.vmem [resolvable:$true] %s1689
      %1692 = dma.vmem_to_hbm [thread:$0]  %s1690, 32, %s7, [#allocation6]
    $region33: #{tpu_custom_call.1} parent=1 // pred_fallthru
      _
    // Predicated region
    $region34: #{tpu_custom_call.1} parent=1 // pred_check
      _
    $region35: #{tpu_custom_call.1} parent=1 // pred_check_branch
      %1694 = sbr.rel (0) target = $region37
    $region36: #{tpu_custom_call.1} parent=1 // pred_region
      %1695 = dma.done [#allocation6], 32
    $region37: #{tpu_custom_call.1} parent=1 // pred_fallthru
      _
    %1696 = vsyncpa [#allocation6], 1

</llo_original>
